<compile_context>
chip_gen: v6e
topology: v6e:2x2x1
jax: 0.10.0
libtpu: 0.0.40
codegen_flags: <defaults>
</compile_context>

<pallas_src>
import functools

import jax
import jax.numpy as jnp
from jax import lax
from jax.experimental import pallas as pl
from jax.experimental.pallas import tpu as pltpu


def _round_up(x, m):
    return ((x + m - 1) // m) * m


def _grid_constant_spec(block_shape, index_map):
    """BlockSpec whose index_map is grid-constant: the block is DMA'd once, so
    request a single VMEM buffer instead of the default 2-deep pipeline."""
    try:
        return pl.BlockSpec(block_shape, index_map, pipeline_mode=pl.Buffered(1))
    except Exception:  # pipeline_mode / Buffered(1) unsupported -> default pipeline
        return pl.BlockSpec(block_shape, index_map)


def _ntxent_kernel(reps_ref, partner_ref, labr_ref, labc_ref, out_ref, *,
                   batch_size, temperature, n_valid, tile_m):
    """One row tile: [TM, n_pad] similarity slab -> partial (unnormalized) loss."""
    i = pl.program_id(0)
    row0 = pl.multiple_of(i * tile_m, tile_m)
    n_pad = reps_ref.shape[0]
    inv_t = 1.0 / float(temperature)

    keys = reps_ref[...]                                  # [n_pad, D] resident across grid
    q_rows = reps_ref[pl.ds(row0, tile_m), :]             # [TM, D]   (MXU operand dtype)
    # Fold 1/T into the query rows (O(TM*D)) instead of an O(TM*n) pass later.
    q = q_rows * jnp.asarray(inv_t, dtype=q_rows.dtype)

    # Similarity slab (already / T): contract the feature dim of BOTH operands
    # (MXU-native, no transpose of keys), f32 accumulation.
    sim = lax.dot_general(q, keys,
                          dimension_numbers=(((1,), (1,)), ((), ())),
                          preferred_element_type=jnp.float32)       # [TM, n_pad]

    # Positive logit: row-wise dot against the pre-rolled partner rows, computed
    # in f32 regardless of the MXU operand dtype (cast BEFORE the multiply).
    pos = jnp.sum(q_rows.astype(jnp.float32) * partner_ref[...].astype(jnp.float32),
                  axis=-1, keepdims=True) * inv_t                    # [TM, 1]

    # Correlated-negatives mask rebuilt in-kernel from narrow iotas:
    # one [TM, n_pad] |delta| slab covers diag and both +/-B diagonals.
    row_ids = lax.broadcasted_iota(jnp.int32, (tile_m, 1), 0) + row0  # [TM, 1]
    col_ids = lax.broadcasted_iota(jnp.int32, (1, n_pad), 1)          # [1, n_pad]
    adelta = jnp.abs(col_ids - row_ids)                               # [TM, n_pad]
    correlated = ((adelta == 0) | (adelta == batch_size)
                  | (labr_ref[...] == labc_ref[...]))

    # Reference semantics: correlated negatives become logit 0 but remain in the
    # softmax denominator.  Padded columns are dropped with -inf (exp -> 0);
    # applying that AFTER the correlated select makes the -1 label sentinel safe.
    masked = jnp.where(correlated, 0.0, sim)
    if n_pad != n_valid:
        masked = jnp.where(col_ids < n_valid, masked, -jnp.inf)

    row_max = jnp.maximum(pos, jnp.max(masked, axis=-1, keepdims=True))
    sum_exp = (jnp.exp(pos - row_max)
               + jnp.sum(jnp.exp(masked - row_max), axis=-1, keepdims=True))
    per_row = row_max + jnp.log(sum_exp) - pos                        # [TM, 1]
    if n_pad != n_valid:
        per_row = jnp.where(row_ids < n_valid, per_row, 0.0)          # drop padded rows

    out_ref[...] = jnp.sum(per_row, axis=0, keepdims=True).reshape(1, 1, 1)


def ntxent_loss_neg(zis, zjs, lis, ljs, *, batch_size, temperature,
                    use_cosine_similarity=True, mxu_dtype=None):
    """JAX/Pallas equivalent of NTXentLossNeg.forward(zis, zjs, lis, ljs).

    mxu_dtype=None auto-selects the MXU operand dtype: bfloat16 when
    use_cosine_similarity=True (bounded logits, fast MXU path on every TPU
    generation), float32 otherwise (unbounded dot-similarity logits).  Softmax /
    LSE math is always f32.
    """
    n = 2 * batch_size
    d = zis.shape[-1]

    if mxu_dtype is None:
        mxu_dtype = jnp.bfloat16 if use_cosine_similarity else jnp.float32

    # --- glue (all O(n*D) / O(n), negligible vs the O(n^2*D) kernel) ---------
    reps = jnp.concatenate([zjs, zis], axis=0).astype(jnp.float32)       # [n, D]
    if use_cosine_similarity:
        norm = jnp.sqrt(jnp.sum(reps * reps, axis=-1, keepdims=True))
        reps = reps / jnp.maximum(norm, 1e-8)
    labels = jnp.concatenate([ljs, lis], axis=0).astype(jnp.int32)       # [n]
    # partner[r] = reps[(r + B) % n]  -> positives are a row-wise dot in-kernel.
    partner = jnp.roll(reps, -batch_size, axis=0)

    reps = reps.astype(mxu_dtype)
    partner = partner.astype(mxu_dtype)
    itemsize = jnp.dtype(mxu_dtype).itemsize

    # --- tiling: lane-dense n_pad, VMEM-aware tile_m, g >= 2 for megacore ----
    n_pad = _round_up(n, 256)                  # full-lane slabs, MXU-friendly N
    try:
        vmem_cap = int(pltpu.get_tpu_info().vmem_capacity_bytes)
    except Exception:
        vmem_cap = 64 << 20                    # conservative: v7x per-TC VMEM
    budget = (vmem_cap * 3) // 4               # never request the full physical VMEM

    def _estimate(tm_):
        resident = n_pad * d * itemsize + n_pad * 4          # reps + col labels (x1, Buffered(1))
        per_tile = 2 * (tm_ * d * itemsize + tm_ * 4)        # partner + row labels (x2 pipeline)
        slabs = 6 * tm_ * n_pad * 4                          # ~6 live f32/i32 slab temps
        return resident + per_tile + slabs + (2 << 20)

    tile_m = None
    for cand in (512, 256, 128, 64):
        if n_pad % cand == 0 and n_pad // cand >= 2 and _estimate(cand) <= budget:
            tile_m = cand
            break
    if tile_m is None:
        tile_m = 64
        # TODO(synk): for n >~ 16k on v7x, add a column-tiled (flash-style) grid
        # axis with an online running max/sum so VMEM stops scaling with n.
    g = n_pad // tile_m

    pad = n_pad - n
    if pad:
        reps = jnp.pad(reps, ((0, pad), (0, 0)))
        partner = jnp.pad(partner, ((0, pad), (0, 0)))
        # -1 sentinel is safe: padded columns are forced to -inf after the
        # correlated select, and padded rows are zeroed out of the sum.
        labels = jnp.pad(labels, (0, pad), constant_values=-1)

    lab_row = labels.reshape(n_pad, 1)
    lab_col = labels.reshape(1, n_pad)

    vmem_est = _estimate(tile_m)
    vmem_limit = None
    if vmem_est > (16 << 20):                  # v5e's default scoped limit is 16 MiB
        vmem_limit = min(_round_up(vmem_est, 1 << 20), budget)

    kernel = functools.partial(
        _ntxent_kernel, batch_size=batch_size, temperature=float(temperature),
        n_valid=n, tile_m=tile_m)

    cost = pl.CostEstimate(
        flops=int(2 * n_pad * n_pad * d + 12 * n_pad * n_pad),
        transcendentals=int(n_pad * (n_pad + 1)),
        bytes_accessed=int(2 * n_pad * d * itemsize + 2 * n_pad * 4 + g * 4))

    partials = pl.pallas_call(
        kernel,
        out_shape=jax.ShapeDtypeStruct((g, 1, 1), jnp.float32),
        grid=(g,),
        in_specs=[
            _grid_constant_spec((n_pad, d), lambda i: (0, 0)),   # reps: resident, 1 buffer
            pl.BlockSpec((tile_m, d), lambda i: (i, 0)),         # partner rows (this tile)
            pl.BlockSpec((tile_m, 1), lambda i: (i, 0)),         # row labels (this tile)
            _grid_constant_spec((1, n_pad), lambda i: (0, 0)),   # column labels: 1 buffer
        ],
        out_specs=pl.BlockSpec((1, 1, 1), lambda i: (i, 0, 0)),
        compiler_params=pltpu.CompilerParams(
            dimension_semantics=("parallel",),                   # v7x: 2 TCs split row tiles
            vmem_limit_bytes=vmem_limit),
        cost_estimate=cost,
    )(reps, partner, lab_row, lab_col)

    return jnp.sum(partials) / n


def _reference(zis, zjs, lis, ljs, batch_size, temperature, use_cosine=True):
    """Pure-JAX reference mirroring the PyTorch forward, for verification."""
    n = 2 * batch_size
    reps = jnp.concatenate([zjs, zis], axis=0).astype(jnp.float32)
    if use_cosine:
        norm = jnp.linalg.norm(reps, axis=-1, keepdims=True)
        reps = reps / jnp.maximum(norm, 1e-8)
    sim = jnp.matmul(reps, reps.T, precision=lax.Precision.HIGHEST)
    l_pos = jnp.diagonal(sim, batch_size)
    r_pos = jnp.diagonal(sim, -batch_size)
    positives = jnp.concatenate([l_pos, r_pos]).reshape(n, 1)
    y = jnp.concatenate([ljs, lis])
    mask = 1.0 - jnp.clip(
        jnp.eye(n) + jnp.eye(n, k=-batch_size) + jnp.eye(n, k=batch_size)
        + (y[:, None] == y[None, :]).astype(jnp.float32), 0.0, 1.0)
    negatives = sim * mask
    logits = jnp.concatenate([positives, negatives], axis=1) / temperature
    lse = jax.scipy.special.logsumexp(logits, axis=-1)
    loss = jnp.sum(lse - logits[:, 0])
    return loss / n


if __name__ == "__main__":
    key = jax.random.PRNGKey(0)
    k1, k2, k3, k4 = jax.random.split(key, 4)

    batch_size, feat_dim, temperature = 4, 32, 0.5
    zis = jax.random.normal(k1, (batch_size, feat_dim), dtype=jnp.float32)
    zjs = jax.random.normal(k2, (batch_size, feat_dim), dtype=jnp.float32)
    lis = jax.random.randint(k3, (batch_size,), 0, 4, dtype=jnp.int32)
    ljs = jax.random.randint(k4, (batch_size,), 0, 4, dtype=jnp.int32)

    # 1) Cosine similarity, default (bf16 MXU operands, f32 accumulation/softmax).
    loss_bf16 = jax.block_until_ready(
        ntxent_loss_neg(zis, zjs, lis, ljs, batch_size=batch_size,
                        temperature=temperature, use_cosine_similarity=True))
    ref1 = _reference(zis, zjs, lis, ljs, batch_size, temperature, use_cosine=True)
    assert jnp.allclose(loss_bf16, ref1, rtol=1e-2, atol=1e-2), (loss_bf16, ref1)

    # 2) Cosine similarity, explicit f32 MXU operands (tight tolerance).
    loss_f32 = jax.block_until_ready(
        ntxent_loss_neg(zis, zjs, lis, ljs, batch_size=batch_size,
                        temperature=temperature, use_cosine_similarity=True,
                        mxu_dtype=jnp.float32))
    assert jnp.allclose(loss_f32, ref1, rtol=1e-3, atol=1e-3), (loss_f32, ref1)

    # 3) Dot similarity + odd batch (padding path); auto-selects f32 operands.
    batch_size2 = 3
    zis2, zjs2, lis2, ljs2 = zis[:3], zjs[:3], lis[:3], ljs[:3]
    loss2 = jax.block_until_ready(
        ntxent_loss_neg(zis2, zjs2, lis2, ljs2, batch_size=batch_size2,
                        temperature=temperature, use_cosine_similarity=False))
    ref2 = _reference(zis2, zjs2, lis2, ljs2, batch_size2, temperature, use_cosine=False)
    assert jnp.allclose(loss2, ref2, rtol=1e-3, atol=1e-3), (loss2, ref2)

    print("KERNEL_OK")
</pallas_src>

<mosaic_0001>
module attributes {stable_mosaic.version = 11 : i64} {
  func.func @_ntxent_kernel(%arg0: i32, %arg1: memref<256x32xbf16, #tpu.memory_space<vmem>>, %arg2: memref<128x32xbf16, #tpu.memory_space<vmem>>, %arg3: memref<128x1xi32, #tpu.memory_space<vmem>>, %arg4: memref<1x256xi32, #tpu.memory_space<vmem>>, %arg5: memref<1x1x1xf32, #tpu.memory_space<vmem>>) attributes {dimension_semantics = [#tpu.dimension_semantics<parallel>], iteration_bounds = array<i64: 2>, scalar_prefetch = 0 : i64, scratch_operands = 0 : i64, tpu.core_type = #tpu.core_type<tc>, window_params = [{pipeline_mode = #tpu.pipeline_mode<synchronous>, transform_indices = @transform_0, window_bounds = array<i64: 256, 32>}, {transform_indices = @transform_1, window_bounds = array<i64: 128, 32>}, {transform_indices = @transform_2, window_bounds = array<i64: 128, 1>}, {pipeline_mode = #tpu.pipeline_mode<synchronous>, transform_indices = @transform_3, window_bounds = array<i64: 1, 256>}, {transform_indices = @transform_4, window_bounds = array<i64: 1, 1, 1>}]} {
    %c128_i32 = arith.constant 128 : i32
    %0 = arith.muli %arg0, %c128_i32 : i32
    %1 = tpu.assume_multiple %0, 128 : i32
    %c0 = arith.constant 0 : index
    %c0_0 = arith.constant 0 : index
    %2 = vector.load %arg1[%c0, %c0_0] : memref<256x32xbf16, #tpu.memory_space<vmem>>, vector<256x32xbf16>
    %3 = arith.index_cast %1 : i32 to index
    %c0_1 = arith.constant 0 : index
    %4 = vector.load %arg1[%3, %c0_1] : memref<256x32xbf16, #tpu.memory_space<vmem>>, vector<128x32xbf16>
    %cst = arith.constant 2.000000e+00 : bf16
    %5 = vector.broadcast %cst : bf16 to vector<128x32xbf16>
    %6 = arith.mulf %4, %5 : vector<128x32xbf16>
    %cst_2 = arith.constant dense<0.000000e+00> : vector<128x256xf32>
    %7 = tpu.matmul %6, %2, %cst_2 {dimension_numbers = #tpu.dot_dimension_numbers<[1], [1], [0], [0], [0, 0, 1, 0], [], []>} : vector<128x32xbf16>, vector<256x32xbf16>, vector<128x256xf32> -> vector<128x256xf32>
    %8 = arith.extf %4 : vector<128x32xbf16> to vector<128x32xf32>
    %c0_3 = arith.constant 0 : index
    %c0_4 = arith.constant 0 : index
    %9 = vector.load %arg2[%c0_3, %c0_4] : memref<128x32xbf16, #tpu.memory_space<vmem>>, vector<128x32xbf16>
    %10 = arith.extf %9 : vector<128x32xbf16> to vector<128x32xf32>
    %11 = arith.mulf %8, %10 : vector<128x32xf32>
    %cst_5 = arith.constant dense<0.000000e+00> : vector<128xf32>
    %12 = vector.multi_reduction <add>, %11, %cst_5 [1] : vector<128x32xf32> to vector<128xf32>
    %13 = vector.shape_cast %12 : vector<128xf32> to vector<128x1xf32>
    %cst_6 = arith.constant 2.000000e+00 : f32
    %14 = vector.broadcast %cst_6 : f32 to vector<128x1xf32>
    %15 = arith.mulf %13, %14 : vector<128x1xf32>
    %16 = tpu.iota {dimensions = array<i32: 0>} : vector<128x1xi32>
    %17 = vector.broadcast %1 : i32 to vector<128x1xi32>
    %18 = arith.addi %16, %17 : vector<128x1xi32>
    %19 = tpu.iota {dimensions = array<i32: 1>} : vector<1x256xi32>
    %20 = vector.broadcast %19 : vector<1x256xi32> to vector<128x256xi32>
    %21 = vector.broadcast %18 : vector<128x1xi32> to vector<128x256xi32>
    %22 = arith.subi %20, %21 : vector<128x256xi32>
    %23 = math.absi %22 : vector<128x256xi32>
    %c0_i32 = arith.constant 0 : i32
    %24 = vector.broadcast %c0_i32 : i32 to vector<128x256xi32>
    %25 = arith.cmpi eq, %23, %24 : vector<128x256xi32>
    %c4_i32 = arith.constant 4 : i32
    %26 = vector.broadcast %c4_i32 : i32 to vector<128x256xi32>
    %27 = arith.cmpi eq, %23, %26 : vector<128x256xi32>
    %28 = arith.ori %25, %27 : vector<128x256xi1>
    %c0_7 = arith.constant 0 : index
    %c0_8 = arith.constant 0 : index
    %29 = vector.load %arg3[%c0_7, %c0_8] : memref<128x1xi32, #tpu.memory_space<vmem>>, vector<128x1xi32>
    %c0_9 = arith.constant 0 : index
    %c0_10 = arith.constant 0 : index
    %30 = vector.load %arg4[%c0_9, %c0_10] : memref<1x256xi32, #tpu.memory_space<vmem>>, vector<1x256xi32>
    %31 = vector.broadcast %29 : vector<128x1xi32> to vector<128x256xi32>
    %32 = vector.broadcast %30 : vector<1x256xi32> to vector<128x256xi32>
    %33 = arith.cmpi eq, %31, %32 : vector<128x256xi32>
    %34 = arith.ori %28, %33 : vector<128x256xi1>
    %cst_11 = arith.constant 0.000000e+00 : f32
    %35 = vector.broadcast %cst_11 : f32 to vector<128x256xf32>
    %36 = arith.select %34, %35, %7 : vector<128x256xi1>, vector<128x256xf32>
    %c8_i32 = arith.constant 8 : i32
    %37 = vector.broadcast %c8_i32 : i32 to vector<1x256xi32>
    %38 = arith.cmpi slt, %19, %37 : vector<1x256xi32>
    %cst_12 = arith.constant 0xFF800000 : f32
    %39 = vector.shape_cast %38 : vector<1x256xi1> to vector<1x256xi1>
    %40 = vector.broadcast %39 : vector<1x256xi1> to vector<128x256xi1>
    %41 = vector.broadcast %cst_12 : f32 to vector<128x256xf32>
    %42 = arith.select %40, %36, %41 : vector<128x256xi1>, vector<128x256xf32>
    %cst_13 = arith.constant dense<0xFF800000> : vector<128xf32>
    %43 = vector.multi_reduction <maximumf>, %42, %cst_13 [1] : vector<128x256xf32> to vector<128xf32>
    %44 = vector.shape_cast %43 : vector<128xf32> to vector<128x1xf32>
    %45 = arith.maximumf %15, %44 : vector<128x1xf32>
    %46 = arith.subf %15, %45 : vector<128x1xf32>
    %47 = math.exp %46 : vector<128x1xf32>
    %48 = vector.broadcast %45 : vector<128x1xf32> to vector<128x256xf32>
    %49 = arith.subf %42, %48 : vector<128x256xf32>
    %50 = math.exp %49 : vector<128x256xf32>
    %cst_14 = arith.constant dense<0.000000e+00> : vector<128xf32>
    %51 = vector.multi_reduction <add>, %50, %cst_14 [1] : vector<128x256xf32> to vector<128xf32>
    %52 = vector.shape_cast %51 : vector<128xf32> to vector<128x1xf32>
    %53 = arith.addf %47, %52 : vector<128x1xf32>
    %54 = math.log %53 : vector<128x1xf32>
    %55 = arith.addf %45, %54 : vector<128x1xf32>
    %56 = arith.subf %55, %15 : vector<128x1xf32>
    %c8_i32_15 = arith.constant 8 : i32
    %57 = vector.broadcast %c8_i32_15 : i32 to vector<128x1xi32>
    %58 = arith.cmpi slt, %18, %57 : vector<128x1xi32>
    %cst_16 = arith.constant 0.000000e+00 : f32
    %59 = vector.broadcast %cst_16 : f32 to vector<128x1xf32>
    %60 = arith.select %58, %56, %59 : vector<128x1xi1>, vector<128x1xf32>
    %cst_17 = arith.constant dense<0.000000e+00> : vector<1xf32>
    %61 = vector.multi_reduction <add>, %60, %cst_17 [0] : vector<128x1xf32> to vector<1xf32>
    %62 = vector.shape_cast %61 : vector<1xf32> to vector<1x1xf32>
    %63 = vector.shape_cast %62 : vector<1x1xf32> to vector<1x1x1xf32>
    %c0_18 = arith.constant 0 : index
    %c0_19 = arith.constant 0 : index
    %c0_20 = arith.constant 0 : index
    %64 = vector.load %arg5[%c0_18, %c0_19, %c0_20] : memref<1x1x1xf32, #tpu.memory_space<vmem>>, vector<1x1x1xf32>
    tpu.vector_store %arg5[%c0_18, %c0_19, %c0_20], %63 {strides = array<i32>} : memref<1x1x1xf32, #tpu.memory_space<vmem>>, vector<1x1x1xf32>,
    return
  }
  func.func @transform_0(%arg0: i32) -> (i32, i32) {
    %c0_i32 = arith.constant 0 : i32
    %c0_i32_0 = arith.constant 0 : i32
    %c0_i32_1 = arith.constant 0 : i32
    return %c0_i32, %c0_i32_0 : i32, i32
  }
  func.func @transform_1(%arg0: i32) -> (i32, i32) {
    %c0_i32 = arith.constant 0 : i32
    %c0_i32_0 = arith.constant 0 : i32
    return %arg0, %c0_i32 : i32, i32
  }
  func.func @transform_2(%arg0: i32) -> (i32, i32) {
    %c0_i32 = arith.constant 0 : i32
    %c0_i32_0 = arith.constant 0 : i32
    return %arg0, %c0_i32 : i32, i32
  }
  func.func @transform_3(%arg0: i32) -> (i32, i32) {
    %c0_i32 = arith.constant 0 : i32
    %c0_i32_0 = arith.constant 0 : i32
    %c0_i32_1 = arith.constant 0 : i32
    return %c0_i32, %c0_i32_0 : i32, i32
  }
  func.func @transform_4(%arg0: i32) -> (i32, i32, i32) {
    %c0_i32 = arith.constant 0 : i32
    %c0_i32_0 = arith.constant 0 : i32
    %c0_i32_1 = arith.constant 0 : i32
    return %arg0, %c0_i32, %c0_i32_0 : i32, i32, i32
  }
}

</mosaic_0001>

<llo_original>
// kernel: tpu_custom_call.1
$region0: #{tpu_custom_call.1}
  #allocation0 [shape = 'u32[]', space=smem, size = 0x4, offset = 0x4, fixed_abs, tag = 'smem constant byte address 0x4 - core index']
  #allocation1 [shape = 'u32[144,128]{1,0:T(1,128)}', space=vmem, size = 0x12000, scoped, tag = 'internal scratch']
  %s0 = inlined_call_operand.vmem [shape: bf16[256,32], index: 0, kind: input, shape index: {}]
  %s1 = inlined_call_operand.vmem [shape: bf16[256,32], index: 1, kind: input, shape index: {}]
  %s2 = inlined_call_operand.vmem [shape: s32[256,1], index: 2, kind: input, shape index: {}]
  %s3 = inlined_call_operand.vmem [shape: s32[1,256], index: 3, kind: input, shape index: {}]
  %s4 = inlined_call_operand.vmem [shape: f32[2,1,1], index: 4, kind: output, shape index: {}]
  %s5 = sld [smem:[#allocation0]]
  $region49: #{tpu_custom_call.1} parent=0
    _
  %s7 = ssub.s32 1, %s5
  %s8 = scalar_select 0, %s7, %s5
  loop: start=0, step=1, limit=4
  $region2: #{tpu_custom_call.1} parent=0 // loop_pre_header
    _
  $region3: #{tpu_custom_call.1} parent=0 // loop_header
    %s10 = sphi 0, %s14
    %p11 = scmp.ge.s32.totalorder %s10, 4
    %s18 = sphi 0, %s18
    %s20 = sphi 0, %s18
    %s21 = sphi 0, %s20
    %s35 = sphi 0, %s21
    %s41 = sphi 0, %s43
    %s44 = sphi 0, %s41
    %s45 = sphi 0, %s44
    %s61 = sphi 0, %s45
    %s67 = sphi 0, %s69
    %s70 = sphi 0, %s67
    %s71 = sphi 0, %s70
    %s87 = sphi 0, %s71
    %s91 = sphi 0, %s91
    %s93 = sphi 0, %s91
    %s94 = sphi 0, %s93
    %s108 = sphi 0, %s94
    %s114 = sphi 0, %s116
    %s117 = sphi 0, %s114
    %s118 = sphi 0, %s117
    %s134 = sphi 0, %s118
  $region4: #{tpu_custom_call.1} parent=0 // loop_header_branch
    %13 = sbr.rel (%p11) target = $region8
  $region5: #{tpu_custom_call.1} parent=0 // loop_body
    %s15 = ssub.s32 %s10, 1
    %s16 = ssub.s32 %s10, 2
    %s17 = sadd.s32 %s10, 1
    %s19 = sadd.s32 %s18, 1
    %p22 = scmp.eq.s32.totalorder %s10, 1
    %p23 = scmp.ne.s32.totalorder %s18, %s20
    %p24 = scmp.eq.s32.totalorder %s10, 0
    %p25 = por %p23, %p24
    %p26 = scmp.ne.s32.totalorder %s18, %s20
    %p27 = scmp.eq.s32.totalorder %s15, 1
    %p28 = por %p26, %p27
    %p29 = scmp.ne.s32.totalorder %s20, %s21
    %p30 = scmp.eq.s32.totalorder %s15, 0
    %p31 = por %p29, %p30
    %p32 = scmp.ne.s32.totalorder %s20, %s21
    %p33 = scmp.eq.s32.totalorder %s16, 1
    %p34 = por %p32, %p33
    %p36 = scmp.ne.s32.totalorder %s21, %s35
    %p37 = scmp.eq.s32.totalorder %s16, 0
    %p38 = por %p36, %p37
    %s39 = ssub.s32 %s10, %s17
    %p40 = scmp.eq.s32.totalorder %s39, 0
    %s42 = sadd.s32 %s41, 1
    %s43 = scalar_select %p40, %s41, %s42
    %p46 = pneg %p40
    %p47 = scmp.eq.s32.totalorder %s10, 1
    %p48 = por %p46, %p47
    %p49 = scmp.ne.s32.totalorder %s41, %s44
    %p50 = scmp.eq.s32.totalorder %s10, 0
    %p51 = por %p49, %p50
    %p52 = scmp.ne.s32.totalorder %s41, %s44
    %p53 = scmp.eq.s32.totalorder %s15, 1
    %p54 = por %p52, %p53
    %p55 = scmp.ne.s32.totalorder %s44, %s45
    %p56 = scmp.eq.s32.totalorder %s15, 0
    %p57 = por %p55, %p56
    %p58 = scmp.ne.s32.totalorder %s44, %s45
    %p59 = scmp.eq.s32.totalorder %s16, 1
    %p60 = por %p58, %p59
    %p62 = scmp.ne.s32.totalorder %s45, %s61
    %p63 = scmp.eq.s32.totalorder %s16, 0
    %p64 = por %p62, %p63
    %s65 = ssub.s32 %s10, %s17
    %p66 = scmp.eq.s32.totalorder %s65, 0
    %s68 = sadd.s32 %s67, 1
    %s69 = scalar_select %p66, %s67, %s68
    %p72 = pneg %p66
    %p73 = scmp.eq.s32.totalorder %s10, 1
    %p74 = por %p72, %p73
    %p75 = scmp.ne.s32.totalorder %s67, %s70
    %p76 = scmp.eq.s32.totalorder %s10, 0
    %p77 = por %p75, %p76
    %p78 = scmp.ne.s32.totalorder %s67, %s70
    %p79 = scmp.eq.s32.totalorder %s15, 1
    %p80 = por %p78, %p79
    %p81 = scmp.ne.s32.totalorder %s70, %s71
    %p82 = scmp.eq.s32.totalorder %s15, 0
    %p83 = por %p81, %p82
    %p84 = scmp.ne.s32.totalorder %s70, %s71
    %p85 = scmp.eq.s32.totalorder %s16, 1
    %p86 = por %p84, %p85
    %p88 = scmp.ne.s32.totalorder %s71, %s87
    %p89 = scmp.eq.s32.totalorder %s16, 0
    %p90 = por %p88, %p89
    %s92 = sadd.s32 %s91, 1
    %p95 = scmp.eq.s32.totalorder %s10, 1
    %p96 = scmp.ne.s32.totalorder %s91, %s93
    %p97 = scmp.eq.s32.totalorder %s10, 0
    %p98 = por %p96, %p97
    %p99 = scmp.ne.s32.totalorder %s91, %s93
    %p100 = scmp.eq.s32.totalorder %s15, 1
    %p101 = por %p99, %p100
    %p102 = scmp.ne.s32.totalorder %s93, %s94
    %p103 = scmp.eq.s32.totalorder %s15, 0
    %p104 = por %p102, %p103
    %p105 = scmp.ne.s32.totalorder %s93, %s94
    %p106 = scmp.eq.s32.totalorder %s16, 1
    %p107 = por %p105, %p106
    %p109 = scmp.ne.s32.totalorder %s94, %s108
    %p110 = scmp.eq.s32.totalorder %s16, 0
    %p111 = por %p109, %p110
    %s112 = ssub.s32 %s10, %s17
    %p113 = scmp.eq.s32.totalorder %s112, 0
    %s115 = sadd.s32 %s114, 1
    %s116 = scalar_select %p113, %s114, %s115
    %p119 = pneg %p113
    %p120 = scmp.eq.s32.totalorder %s10, 1
    %p121 = por %p119, %p120
    %p122 = scmp.ne.s32.totalorder %s114, %s117
    %p123 = scmp.eq.s32.totalorder %s10, 0
    %p124 = por %p122, %p123
    %p125 = scmp.ne.s32.totalorder %s114, %s117
    %p126 = scmp.eq.s32.totalorder %s15, 1
    %p127 = por %p125, %p126
    %p128 = scmp.ne.s32.totalorder %s117, %s118
    %p129 = scmp.eq.s32.totalorder %s15, 0
    %p130 = por %p128, %p129
    %p131 = scmp.ne.s32.totalorder %s117, %s118
    %p132 = scmp.eq.s32.totalorder %s16, 1
    %p133 = por %p131, %p132
    %p135 = scmp.ne.s32.totalorder %s118, %s134
    %p136 = scmp.eq.s32.totalorder %s16, 0
    %p137 = por %p135, %p136
    %p138 = scmp.le.s32.totalorder 1, %s10
    %p139 = scmp.lt.s32.totalorder %s10, 3
    %p140 = pnand %p138, %p139
    %p141 = pneg %p140
    // Predicated region
    $region9: #{tpu_custom_call.1} parent=5 // pred_check
      _
    $region10: #{tpu_custom_call.1} parent=5 // pred_check_branch
      %143 = sbr.rel (%p140) target = $region12
    $region11: #{tpu_custom_call.1} parent=5 // pred_region
      %s144 = ssub.s32 %s10, 1
      // Predicated region
      $region13: #{tpu_custom_call.1} parent=11 // pred_check
        %p145 = pneg %p31
      $region14: #{tpu_custom_call.1} parent=11 // pred_check_branch
        %147 = sbr.rel (%p145) target = $region16
      $region15: #{tpu_custom_call.1} parent=11 // pred_region
        _
      $region16: #{tpu_custom_call.1} parent=11 // pred_fallthru
        _
      // Predicated region
      $region17: #{tpu_custom_call.1} parent=11 // pred_check
        %p148 = pneg %p104
      $region18: #{tpu_custom_call.1} parent=11 // pred_check_branch
        %150 = sbr.rel (%p148) target = $region20
      $region19: #{tpu_custom_call.1} parent=11 // pred_region
        _
      $region20: #{tpu_custom_call.1} parent=11 // pred_fallthru
        _
    $region12: #{tpu_custom_call.1} parent=5 // pred_fallthru
      _
    %p151 = scmp.lt.s32.totalorder %s10, 2
    // Predicated region
    $region21: #{tpu_custom_call.1} parent=5 // pred_check
      %p152 = pneg %p151
    $region22: #{tpu_custom_call.1} parent=5 // pred_check_branch
      %154 = sbr.rel (%p152) target = $region24
    $region23: #{tpu_custom_call.1} parent=5 // pred_region
      // Predicated region
      $region25: #{tpu_custom_call.1} parent=23 // pred_check
        %p155 = pneg %p51
      $region26: #{tpu_custom_call.1} parent=23 // pred_check_branch
        %157 = sbr.rel (%p155) target = $region28
      $region27: #{tpu_custom_call.1} parent=23 // pred_region
        %s158 = smul.u32 16, %s10
        %p159 = scmp.lt.s32.totalorder %s158, 31
        %s160 = scalar_select %p159, %s158, 31
        %s161 = smul.addr %s160, 4
        %s162 = scalar_lea.vmem %s1, %s161
        %s163 = smul.u32 16, %s10
      $region28: #{tpu_custom_call.1} parent=23 // pred_fallthru
        _
      // Predicated region
      $region29: #{tpu_custom_call.1} parent=23 // pred_check
        %p164 = pneg %p77
      $region30: #{tpu_custom_call.1} parent=23 // pred_check_branch
        %166 = sbr.rel (%p164) target = $region32
      $region31: #{tpu_custom_call.1} parent=23 // pred_region
        %s167 = smul.u32 16, %s10
        %p168 = scmp.lt.s32.totalorder %s167, 31
        %s169 = scalar_select %p168, %s167, 31
        %s170 = smul.addr %s169, 8
        %s171 = scalar_lea.vmem %s2, %s170
        %s172 = smul.u32 16, %s10
      $region32: #{tpu_custom_call.1} parent=23 // pred_fallthru
        _
    $region24: #{tpu_custom_call.1} parent=5 // pred_fallthru
      _
    %p173 = scmp.le.s32.totalorder 1, %s10
    %p174 = scmp.lt.s32.totalorder %s10, 3
    %p175 = pnand %p173, %p174
    %p176 = pneg %p175
    // Predicated region
    $region33: #{tpu_custom_call.1} parent=5 // pred_check
      _
    $region34: #{tpu_custom_call.1} parent=5 // pred_check_branch
      %178 = sbr.rel (%p175) target = $region36
    $region35: #{tpu_custom_call.1} parent=5 // pred_region
      %s179 = ssub.s32 %s10, 1
      %p180 = pneg %p31
      %p181 = pneg %p28
      %s182 = smul.u32 16, %s15
      %p183 = scmp.lt.s32.totalorder %s182, 31
      %s184 = scalar_select %p183, %s182, 31
      %s185 = smul.addr %s184, 4
      %s186 = scalar_lea.vmem %s1, %s185
      %p187 = pneg %p57
      %p188 = pneg %p54
      %s189 = smul.u32 16, %s15
      %p190 = scmp.lt.s32.totalorder %s189, 31
      %s191 = scalar_select %p190, %s189, 31
      %s192 = smul.addr %s191, 8
      %s193 = scalar_lea.vmem %s2, %s192
      %p194 = pneg %p83
      %p195 = pneg %p80
      %p196 = pneg %p104
      %p197 = pneg %p101
      %p198 = pneg %p130
      %p199 = pneg %p127
      %p200 = scmp.lt.s32.totalorder %s15, 1
      %s201 = scalar_select %p200, %s15, 1
      %s202 = scalar_lea.vmem %s4, %s201
      %s203 = smul.u32 16, %s15
      %p204 = scmp.lt.s32.totalorder %s203, 31
      %s205 = scalar_select %p204, %s203, 31
      %s206 = smul.addr %s205, 4
      %s207 = scalar_lea.vmem %s1, %s206
      %s208 = smul.u32 16, %s15
      %s209 = smul.u32 16, %s15
      %p210 = scmp.lt.s32.totalorder %s209, 31
      %s211 = scalar_select %p210, %s209, 31
      %s212 = smul.addr %s211, 8
      %s213 = scalar_lea.vmem %s2, %s212
      %s214 = smul.u32 16, %s15
      %p215 = scmp.lt.s32.totalorder %s15, 1
      %s216 = scalar_select %p215, %s15, 1
      %s217 = scalar_lea.vmem %s4, %s216
      %s220 = smul.u32 %s15, 128
      %v221 = vld [vmem:[%s0] sm:$0xf]
      %v222 = vld [vmem:[%s0 + $0x4] sm:$0xf]
      %v223 = vld [vmem:[%s0 + $0x8] sm:$0xf]
      %v224 = vld [vmem:[%s0 + $0xc] sm:$0xf]
      %v225 = vld [vmem:[%s0 + $0x10] sm:$0xf]
      %v226 = vld [vmem:[%s0 + $0x14] sm:$0xf]
      %v227 = vld [vmem:[%s0 + $0x18] sm:$0xf]
      %v228 = vld [vmem:[%s0 + $0x1c] sm:$0xf]
      %v229 = vld [vmem:[%s0 + $0x20] sm:$0xf]
      %v230 = vld [vmem:[%s0 + $0x24] sm:$0xf]
      %v231 = vld [vmem:[%s0 + $0x28] sm:$0xf]
      %v232 = vld [vmem:[%s0 + $0x2c] sm:$0xf]
      %v233 = vld [vmem:[%s0 + $0x30] sm:$0xf]
      %v234 = vld [vmem:[%s0 + $0x34] sm:$0xf]
      %v235 = vld [vmem:[%s0 + $0x38] sm:$0xf]
      %v236 = vld [vmem:[%s0 + $0x3c] sm:$0xf]
      %v237 = vld [vmem:[%s0 + $0x40] sm:$0xf]
      %v238 = vld [vmem:[%s0 + $0x44] sm:$0xf]
      %v239 = vld [vmem:[%s0 + $0x48] sm:$0xf]
      %v240 = vld [vmem:[%s0 + $0x4c] sm:$0xf]
      %v241 = vld [vmem:[%s0 + $0x50] sm:$0xf]
      %v242 = vld [vmem:[%s0 + $0x54] sm:$0xf]
      %v243 = vld [vmem:[%s0 + $0x58] sm:$0xf]
      %v244 = vld [vmem:[%s0 + $0x5c] sm:$0xf]
      %v245 = vld [vmem:[%s0 + $0x60] sm:$0xf]
      %v246 = vld [vmem:[%s0 + $0x64] sm:$0xf]
      %v247 = vld [vmem:[%s0 + $0x68] sm:$0xf]
      %v248 = vld [vmem:[%s0 + $0x6c] sm:$0xf]
      %v249 = vld [vmem:[%s0 + $0x70] sm:$0xf]
      %v250 = vld [vmem:[%s0 + $0x74] sm:$0xf]
      %v251 = vld [vmem:[%s0 + $0x78] sm:$0xf]
      %v252 = vld [vmem:[%s0 + $0x7c] sm:$0xf]
      %s253 = sshra.s32 %s220, 3
      %s254 = sand.u32 %s220, 7
      %s255 = smul.addr %s253, 4
      %s256 = scalar_lea.vmem %s0, %s255
      %v257 = vld [vmem:[%s256] sm:$0xf]
      %v258 = vld [vmem:[%s256 + $0x4] sm:$0xf]
      %v259 = vld [vmem:[%s256 + $0x8] sm:$0xf]
      %v260 = vld [vmem:[%s256 + $0xc] sm:$0xf]
      %v261 = vld [vmem:[%s256 + $0x10] sm:$0xf]
      %v262 = vld [vmem:[%s256 + $0x14] sm:$0xf]
      %v263 = vld [vmem:[%s256 + $0x18] sm:$0xf]
      %v264 = vld [vmem:[%s256 + $0x1c] sm:$0xf]
      %v265 = vld [vmem:[%s256 + $0x20] sm:$0xf]
      %v266 = vld [vmem:[%s256 + $0x24] sm:$0xf]
      %v267 = vld [vmem:[%s256 + $0x28] sm:$0xf]
      %v268 = vld [vmem:[%s256 + $0x2c] sm:$0xf]
      %v269 = vld [vmem:[%s256 + $0x30] sm:$0xf]
      %v270 = vld [vmem:[%s256 + $0x34] sm:$0xf]
      %v271 = vld [vmem:[%s256 + $0x38] sm:$0xf]
      %v272 = vld [vmem:[%s256 + $0x3c] sm:$0xf]
      %v273 = vmul.bf16 %v257, 1073758208
      %v274 = vmul.bf16 %v258, 1073758208
      %v275 = vmul.bf16 %v259, 1073758208
      %v276 = vmul.bf16 %v260, 1073758208
      %v277 = vmul.bf16 %v261, 1073758208
      %v278 = vmul.bf16 %v262, 1073758208
      %v279 = vmul.bf16 %v263, 1073758208
      %v280 = vmul.bf16 %v264, 1073758208
      %v281 = vmul.bf16 %v265, 1073758208
      %v282 = vmul.bf16 %v266, 1073758208
      %v283 = vmul.bf16 %v267, 1073758208
      %v284 = vmul.bf16 %v268, 1073758208
      %v285 = vmul.bf16 %v269, 1073758208
      %v286 = vmul.bf16 %v270, 1073758208
      %v287 = vmul.bf16 %v271, 1073758208
      %v288 = vmul.bf16 %v272, 1073758208
      %v305 = vunpack.c.l.b16 %v273
      %v306 = vunpack.c.l.b16 %v274
      %v307 = vunpack.c.l.b16 %v275
      %v308 = vunpack.c.l.b16 %v276
      %v309 = vunpack.c.l.b16 %v277
      %v310 = vunpack.c.l.b16 %v278
      %v311 = vunpack.c.l.b16 %v279
      %v312 = vunpack.c.l.b16 %v280
      %v313 = vunpack.c.l.b16 %v281
      %v314 = vunpack.c.l.b16 %v282
      %v315 = vunpack.c.l.b16 %v283
      %v316 = vunpack.c.l.b16 %v284
      %v317 = vunpack.c.l.b16 %v285
      %v318 = vunpack.c.l.b16 %v286
      %v319 = vunpack.c.l.b16 %v287
      %v320 = vunpack.c.l.b16 %v288
      %v321 = vpack.c.b16 %v306, %v305
      %v322 = vpack.c.b16 %v308, %v307
      %v323 = vpack.c.b16 %v310, %v309
      %v324 = vpack.c.b16 %v312, %v311
      %v325 = vpack.c.b16 %v314, %v313
      %v326 = vpack.c.b16 %v316, %v315
      %v327 = vpack.c.b16 %v318, %v317
      %v328 = vpack.c.b16 %v320, %v319
      %v361 = vunpack.c.l.b16 %v221
      %v362 = vunpack.c.l.b16 %v222
      %v363 = vunpack.c.l.b16 %v223
      %v364 = vunpack.c.l.b16 %v224
      %v365 = vunpack.c.l.b16 %v225
      %v366 = vunpack.c.l.b16 %v226
      %v367 = vunpack.c.l.b16 %v227
      %v368 = vunpack.c.l.b16 %v228
      %v369 = vunpack.c.l.b16 %v229
      %v370 = vunpack.c.l.b16 %v230
      %v371 = vunpack.c.l.b16 %v231
      %v372 = vunpack.c.l.b16 %v232
      %v373 = vunpack.c.l.b16 %v233
      %v374 = vunpack.c.l.b16 %v234
      %v375 = vunpack.c.l.b16 %v235
      %v376 = vunpack.c.l.b16 %v236
      %v377 = vunpack.c.l.b16 %v237
      %v378 = vunpack.c.l.b16 %v238
      %v379 = vunpack.c.l.b16 %v239
      %v380 = vunpack.c.l.b16 %v240
      %v381 = vunpack.c.l.b16 %v241
      %v382 = vunpack.c.l.b16 %v242
      %v383 = vunpack.c.l.b16 %v243
      %v384 = vunpack.c.l.b16 %v244
      %v385 = vunpack.c.l.b16 %v245
      %v386 = vunpack.c.l.b16 %v246
      %v387 = vunpack.c.l.b16 %v247
      %v388 = vunpack.c.l.b16 %v248
      %v389 = vunpack.c.l.b16 %v249
      %v390 = vunpack.c.l.b16 %v250
      %v391 = vunpack.c.l.b16 %v251
      %v392 = vunpack.c.l.b16 %v252
      %v393 = vpack.c.b16 %v362, %v361
      %v394 = vpack.c.b16 %v364, %v363
      %v395 = vpack.c.b16 %v366, %v365
      %v396 = vpack.c.b16 %v368, %v367
      %v397 = vpack.c.b16 %v370, %v369
      %v398 = vpack.c.b16 %v372, %v371
      %v399 = vpack.c.b16 %v374, %v373
      %v400 = vpack.c.b16 %v376, %v375
      %v401 = vpack.c.b16 %v378, %v377
      %v402 = vpack.c.b16 %v380, %v379
      %v403 = vpack.c.b16 %v382, %v381
      %v404 = vpack.c.b16 %v384, %v383
      %v405 = vpack.c.b16 %v386, %v385
      %v406 = vpack.c.b16 %v388, %v387
      %v407 = vpack.c.b16 %v390, %v389
      %v408 = vpack.c.b16 %v392, %v391
      %vm409 = vcmask 261120
      %v411 = vsel %vm409, %v321, 0
      %v414 = vsel %vm409, %v322, 0
      %v417 = vsel %vm409, %v323, 0
      %v420 = vsel %vm409, %v324, 0
      %v423 = vsel %vm409, %v325, 0
      %v426 = vsel %vm409, %v326, 0
      %v429 = vsel %vm409, %v327, 0
      %v432 = vsel %vm409, %v328, 0
      %v435 = vsel %vm409, %v393, 0
      %v438 = vsel %vm409, %v394, 0
      %v441 = vsel %vm409, %v395, 0
      %v444 = vsel %vm409, %v396, 0
      %v447 = vsel %vm409, %v397, 0
      %v450 = vsel %vm409, %v398, 0
      %v453 = vsel %vm409, %v399, 0
      %v456 = vsel %vm409, %v400, 0
      %v459 = vsel %vm409, %v401, 0
      %v462 = vsel %vm409, %v402, 0
      %v465 = vsel %vm409, %v403, 0
      %v468 = vsel %vm409, %v404, 0
      %v471 = vsel %vm409, %v405, 0
      %v474 = vsel %vm409, %v406, 0
      %v477 = vsel %vm409, %v407, 0
      %v480 = vsel %vm409, %v408, 0
      %482 = vmatprep.subr.bf16.mxu0 0
      %483 = vmatpush1.bf16.xpose.msra.mxu0 %v456
      %484 = vmatprep.subr.bf16.mxu0 0
      %485 = vmatpush1.bf16.xpose.msra.mxu0 %v453
      %486 = vmatprep.subr.bf16.mxu0 0
      %487 = vmatpush1.bf16.xpose.msra.mxu0 %v450
      %488 = vmatprep.subr.bf16.mxu0 0
      %489 = vmatpush1.bf16.xpose.msra.mxu0 %v447
      %490 = vmatprep.subr.bf16.mxu0 0
      %491 = vmatpush1.bf16.xpose.msra.mxu0 %v444
      %492 = vmatprep.subr.bf16.mxu0 0
      %493 = vmatpush1.bf16.xpose.msra.mxu0 %v441
      %494 = vmatprep.subr.bf16.mxu0 0
      %495 = vmatpush1.bf16.xpose.msra.mxu0 %v438
      %496 = vmatprep.subr.bf16.mxu0 0
      %497 = vmatpush1.bf16.xpose.msra.mxu0 %v435
      %498 = vmatprep.subr.bf16.mxu0 0
      %499 = vmatpush2.bf16.xpose.msra.mxu0 %v480
      %500 = vmatprep.subr.bf16.mxu0 0
      %501 = vmatpush2.bf16.xpose.msra.mxu0 %v477
      %502 = vmatprep.subr.bf16.mxu0 0
      %503 = vmatpush2.bf16.xpose.msra.mxu0 %v474
      %504 = vmatprep.subr.bf16.mxu0 0
      %505 = vmatpush2.bf16.xpose.msra.mxu0 %v471
      %506 = vmatprep.subr.bf16.mxu0 0
      %507 = vmatpush2.bf16.xpose.msra.mxu0 %v468
      %508 = vmatprep.subr.bf16.mxu0 0
      %509 = vmatpush2.bf16.xpose.msra.mxu0 %v465
      %510 = vmatprep.subr.bf16.mxu0 0
      %511 = vmatpush2.bf16.xpose.msra.mxu0 %v462
      %512 = vmatprep.subr.bf16.mxu0 0
      %513 = vmatpush2.bf16.xpose.msra.mxu0 %v459
      %514 = vmatprep.mubr.bf16.mxu0 0
      %515 = vmatmul.mubr.bf16.gmra.mxu0 %v411
      %v516 = vpop.f32.mrf.mxu0
      %v517 = vadd.f32 0.0, %v516
      %v518 = vpop.f32.mrf.mxu0
      %v519 = vadd.f32 0.0, %v518
      %v520 = vpop.f32.mrf.mxu0
      %v521 = vadd.f32 0.0, %v520
      %v522 = vpop.f32.mrf.mxu0
      %v523 = vadd.f32 0.0, %v522
      %524 = vmatprep.mubr.bf16.mxu0 0
      %525 = vmatmul.mubr.bf16.gmra.mxu0 %v414
      %v526 = vpop.f32.mrf.mxu0
      %v527 = vadd.f32 0.0, %v526
      %v528 = vpop.f32.mrf.mxu0
      %v529 = vadd.f32 0.0, %v528
      %v530 = vpop.f32.mrf.mxu0
      %v531 = vadd.f32 0.0, %v530
      %v532 = vpop.f32.mrf.mxu0
      %v533 = vadd.f32 0.0, %v532
      %534 = vmatprep.mubr.bf16.mxu0 0
      %535 = vmatmul.mubr.bf16.gmra.mxu0 %v417
      %v536 = vpop.f32.mrf.mxu0
      %v537 = vadd.f32 0.0, %v536
      %v538 = vpop.f32.mrf.mxu0
      %v539 = vadd.f32 0.0, %v538
      %v540 = vpop.f32.mrf.mxu0
      %v541 = vadd.f32 0.0, %v540
      %v542 = vpop.f32.mrf.mxu0
      %v543 = vadd.f32 0.0, %v542
      %544 = vmatprep.mubr.bf16.mxu0 0
      %545 = vmatmul.mubr.bf16.gmra.mxu0 %v420
      %v546 = vpop.f32.mrf.mxu0
      %v547 = vadd.f32 0.0, %v546
      %v548 = vpop.f32.mrf.mxu0
      %v549 = vadd.f32 0.0, %v548
      %v550 = vpop.f32.mrf.mxu0
      %v551 = vadd.f32 0.0, %v550
      %v552 = vpop.f32.mrf.mxu0
      %v553 = vadd.f32 0.0, %v552
      %554 = vmatprep.mubr.bf16.mxu0 0
      %555 = vmatmul.mubr.bf16.gmra.mxu0 %v423
      %v556 = vpop.f32.mrf.mxu0
      %v557 = vadd.f32 0.0, %v556
      %v558 = vpop.f32.mrf.mxu0
      %v559 = vadd.f32 0.0, %v558
      %v560 = vpop.f32.mrf.mxu0
      %v561 = vadd.f32 0.0, %v560
      %v562 = vpop.f32.mrf.mxu0
      %v563 = vadd.f32 0.0, %v562
      %564 = vmatprep.mubr.bf16.mxu0 0
      %565 = vmatmul.mubr.bf16.gmra.mxu0 %v426
      %v566 = vpop.f32.mrf.mxu0
      %v567 = vadd.f32 0.0, %v566
      %v568 = vpop.f32.mrf.mxu0
      %v569 = vadd.f32 0.0, %v568
      %v570 = vpop.f32.mrf.mxu0
      %v571 = vadd.f32 0.0, %v570
      %v572 = vpop.f32.mrf.mxu0
      %v573 = vadd.f32 0.0, %v572
      %574 = vmatprep.mubr.bf16.mxu0 0
      %575 = vmatmul.mubr.bf16.gmra.mxu0 %v429
      %v576 = vpop.f32.mrf.mxu0
      %v577 = vadd.f32 0.0, %v576
      %v578 = vpop.f32.mrf.mxu0
      %v579 = vadd.f32 0.0, %v578
      %v580 = vpop.f32.mrf.mxu0
      %v581 = vadd.f32 0.0, %v580
      %v582 = vpop.f32.mrf.mxu0
      %v583 = vadd.f32 0.0, %v582
      %584 = vmatprep.mubr.bf16.mxu0 0
      %585 = vmatmul.mubr.bf16.gmra.mxu0 %v432
      %v586 = vpop.f32.mrf.mxu0
      %v587 = vadd.f32 0.0, %v586
      %v588 = vpop.f32.mrf.mxu0
      %v589 = vadd.f32 0.0, %v588
      %v590 = vpop.f32.mrf.mxu0
      %v591 = vadd.f32 0.0, %v590
      %v592 = vpop.f32.mrf.mxu0
      %v593 = vadd.f32 0.0, %v592
      %594 = vdwg.mxu0
      %v595 = vunpack.c.l.bf16 %v257
      %v596 = vunpack.c.l.bf16 %v258
      %v597 = vunpack.c.l.bf16 %v259
      %v598 = vunpack.c.l.bf16 %v260
      %v599 = vunpack.c.l.bf16 %v261
      %v600 = vunpack.c.l.bf16 %v262
      %v601 = vunpack.c.l.bf16 %v263
      %v602 = vunpack.c.l.bf16 %v264
      %v603 = vunpack.c.l.bf16 %v265
      %v604 = vunpack.c.l.bf16 %v266
      %v605 = vunpack.c.l.bf16 %v267
      %v606 = vunpack.c.l.bf16 %v268
      %v607 = vunpack.c.l.bf16 %v269
      %v608 = vunpack.c.l.bf16 %v270
      %v609 = vunpack.c.l.bf16 %v271
      %v610 = vunpack.c.l.bf16 %v272
      %v611 = vld [vmem:[%s207] sm:$0xf]
      %v612 = vld [vmem:[%s207 + $0x4] sm:$0xf]
      %v613 = vld [vmem:[%s207 + $0x8] sm:$0xf]
      %v614 = vld [vmem:[%s207 + $0xc] sm:$0xf]
      %v615 = vld [vmem:[%s207 + $0x10] sm:$0xf]
      %v616 = vld [vmem:[%s207 + $0x14] sm:$0xf]
      %v617 = vld [vmem:[%s207 + $0x18] sm:$0xf]
      %v618 = vld [vmem:[%s207 + $0x1c] sm:$0xf]
      %v619 = vld [vmem:[%s207 + $0x20] sm:$0xf]
      %v620 = vld [vmem:[%s207 + $0x24] sm:$0xf]
      %v621 = vld [vmem:[%s207 + $0x28] sm:$0xf]
      %v622 = vld [vmem:[%s207 + $0x2c] sm:$0xf]
      %v623 = vld [vmem:[%s207 + $0x30] sm:$0xf]
      %v624 = vld [vmem:[%s207 + $0x34] sm:$0xf]
      %v625 = vld [vmem:[%s207 + $0x38] sm:$0xf]
      %v626 = vld [vmem:[%s207 + $0x3c] sm:$0xf]
      %v627 = vunpack.c.l.bf16 %v611
      %v628 = vunpack.c.l.bf16 %v612
      %v629 = vunpack.c.l.bf16 %v613
      %v630 = vunpack.c.l.bf16 %v614
      %v631 = vunpack.c.l.bf16 %v615
      %v632 = vunpack.c.l.bf16 %v616
      %v633 = vunpack.c.l.bf16 %v617
      %v634 = vunpack.c.l.bf16 %v618
      %v635 = vunpack.c.l.bf16 %v619
      %v636 = vunpack.c.l.bf16 %v620
      %v637 = vunpack.c.l.bf16 %v621
      %v638 = vunpack.c.l.bf16 %v622
      %v639 = vunpack.c.l.bf16 %v623
      %v640 = vunpack.c.l.bf16 %v624
      %v641 = vunpack.c.l.bf16 %v625
      %v642 = vunpack.c.l.bf16 %v626
      %v643 = vmul.f32 %v595, %v627
      %v644 = vmul.f32 %v596, %v628
      %v645 = vmul.f32 %v597, %v629
      %v646 = vmul.f32 %v598, %v630
      %v647 = vmul.f32 %v599, %v631
      %v648 = vmul.f32 %v600, %v632
      %v649 = vmul.f32 %v601, %v633
      %v650 = vmul.f32 %v602, %v634
      %v651 = vmul.f32 %v603, %v635
      %v652 = vmul.f32 %v604, %v636
      %v653 = vmul.f32 %v605, %v637
      %v654 = vmul.f32 %v606, %v638
      %v655 = vmul.f32 %v607, %v639
      %v656 = vmul.f32 %v608, %v640
      %v657 = vmul.f32 %v609, %v641
      %v658 = vmul.f32 %v610, %v642
      %v659 = vsel %vm409, %v643, 0.0
      %660 = vadd.xlane.f32.xlu0 %v659
      %v661 = vpop.xlane.xlu0 %660
      %v662 = vsel %vm409, %v644, 0.0
      %663 = vadd.xlane.f32.xlu0 %v662
      %v664 = vpop.xlane.xlu0 %663
      %v665 = vsel %vm409, %v645, 0.0
      %666 = vadd.xlane.f32.xlu0 %v665
      %v667 = vpop.xlane.xlu0 %666
      %v668 = vsel %vm409, %v646, 0.0
      %669 = vadd.xlane.f32.xlu0 %v668
      %v670 = vpop.xlane.xlu0 %669
      %v671 = vsel %vm409, %v647, 0.0
      %672 = vadd.xlane.f32.xlu0 %v671
      %v673 = vpop.xlane.xlu0 %672
      %v674 = vsel %vm409, %v648, 0.0
      %675 = vadd.xlane.f32.xlu0 %v674
      %v676 = vpop.xlane.xlu0 %675
      %v677 = vsel %vm409, %v649, 0.0
      %678 = vadd.xlane.f32.xlu0 %v677
      %v679 = vpop.xlane.xlu0 %678
      %v680 = vsel %vm409, %v650, 0.0
      %681 = vadd.xlane.f32.xlu0 %v680
      %v682 = vpop.xlane.xlu0 %681
      %v683 = vsel %vm409, %v651, 0.0
      %684 = vadd.xlane.f32.xlu0 %v683
      %v685 = vpop.xlane.xlu0 %684
      %v686 = vsel %vm409, %v652, 0.0
      %687 = vadd.xlane.f32.xlu0 %v686
      %v688 = vpop.xlane.xlu0 %687
      %v689 = vsel %vm409, %v653, 0.0
      %690 = vadd.xlane.f32.xlu0 %v689
      %v691 = vpop.xlane.xlu0 %690
      %v692 = vsel %vm409, %v654, 0.0
      %693 = vadd.xlane.f32.xlu0 %v692
      %v694 = vpop.xlane.xlu0 %693
      %v695 = vsel %vm409, %v655, 0.0
      %696 = vadd.xlane.f32.xlu0 %v695
      %v697 = vpop.xlane.xlu0 %696
      %v698 = vsel %vm409, %v656, 0.0
      %699 = vadd.xlane.f32.xlu0 %v698
      %v700 = vpop.xlane.xlu0 %699
      %v701 = vsel %vm409, %v657, 0.0
      %702 = vadd.xlane.f32.xlu0 %v701
      %v703 = vpop.xlane.xlu0 %702
      %v704 = vsel %vm409, %v658, 0.0
      %705 = vadd.xlane.f32.xlu0 %v704
      %v706 = vpop.xlane.xlu0 %705
      %v707 = vmul.f32 %v661, 2.0
      %v708 = vmul.f32 %v664, 2.0
      %v709 = vmul.f32 %v667, 2.0
      %v710 = vmul.f32 %v670, 2.0
      %v711 = vmul.f32 %v673, 2.0
      %v712 = vmul.f32 %v676, 2.0
      %v713 = vmul.f32 %v679, 2.0
      %v714 = vmul.f32 %v682, 2.0
      %v715 = vmul.f32 %v685, 2.0
      %v716 = vmul.f32 %v688, 2.0
      %v717 = vmul.f32 %v691, 2.0
      %v718 = vmul.f32 %v694, 2.0
      %v719 = vmul.f32 %v697, 2.0
      %v720 = vmul.f32 %v700, 2.0
      %v721 = vmul.f32 %v703, 2.0
      %v722 = vmul.f32 %v706, 2.0
      %v723 = vlaneseq
      %v724 = vshrl.u32 %v723, 7
      %v725 = vadd.s32 %v724, 8
      %v726 = vadd.s32 %v724, 16
      %v727 = vadd.s32 %v724, 24
      %v728 = vadd.s32 %v724, 32
      %v729 = vadd.s32 %v724, 40
      %v730 = vadd.s32 %v724, 48
      %v731 = vadd.s32 %v724, 56
      %v732 = vadd.s32 %v724, 64
      %v733 = vadd.s32 %v724, 72
      %v734 = vadd.s32 %v724, 80
      %v735 = vadd.s32 %v724, 88
      %v736 = vadd.s32 %v724, 96
      %v737 = vadd.s32 %v724, 104
      %v738 = vadd.s32 %v724, 112
      %v739 = vadd.s32 %v724, 120
      %v740 = vstv %s220
      %v741 = vadd.s32 %v724, %v740
      %v742 = vadd.s32 %v725, %v740
      %v743 = vadd.s32 %v726, %v740
      %v744 = vadd.s32 %v727, %v740
      %v745 = vadd.s32 %v728, %v740
      %v746 = vadd.s32 %v729, %v740
      %v747 = vadd.s32 %v730, %v740
      %v748 = vadd.s32 %v731, %v740
      %v749 = vadd.s32 %v732, %v740
      %v750 = vadd.s32 %v733, %v740
      %v751 = vadd.s32 %v734, %v740
      %v752 = vadd.s32 %v735, %v740
      %v753 = vadd.s32 %v736, %v740
      %v754 = vadd.s32 %v737, %v740
      %v755 = vadd.s32 %v738, %v740
      %v756 = vadd.s32 %v739, %v740
      %v757 = vlaneseq
      %v758 = vand.u32 %v757, 127
      %v759 = vadd.s32 %v758, 128
      %v760 = vsub.s32 %v758, %v741
      %v761 = vsub.s32 %v759, %v741
      %v762 = vsub.s32 %v758, %v742
      %v763 = vsub.s32 %v759, %v742
      %v764 = vsub.s32 %v758, %v743
      %v765 = vsub.s32 %v759, %v743
      %v766 = vsub.s32 %v758, %v744
      %v767 = vsub.s32 %v759, %v744
      %v768 = vsub.s32 %v758, %v745
      %v769 = vsub.s32 %v759, %v745
      %v770 = vsub.s32 %v758, %v746
      %v771 = vsub.s32 %v759, %v746
      %v772 = vsub.s32 %v758, %v747
      %v773 = vsub.s32 %v759, %v747
      %v774 = vsub.s32 %v758, %v748
      %v775 = vsub.s32 %v759, %v748
      %v776 = vsub.s32 %v758, %v749
      %v777 = vsub.s32 %v759, %v749
      %v778 = vsub.s32 %v758, %v750
      %v779 = vsub.s32 %v759, %v750
      %v780 = vsub.s32 %v758, %v751
      %v781 = vsub.s32 %v759, %v751
      %v782 = vsub.s32 %v758, %v752
      %v783 = vsub.s32 %v759, %v752
      %v784 = vsub.s32 %v758, %v753
      %v785 = vsub.s32 %v759, %v753
      %v786 = vsub.s32 %v758, %v754
      %v787 = vsub.s32 %v759, %v754
      %v788 = vsub.s32 %v758, %v755
      %v789 = vsub.s32 %v759, %v755
      %v790 = vsub.s32 %v758, %v756
      %v791 = vsub.s32 %v759, %v756
      %vm792 = vcmp.lt.s32.totalorder %v760, 0
      %v793 = vsub.s32 0, %v760
      %v794 = vsel %vm792, %v793, %v760
      %vm795 = vcmp.lt.s32.totalorder %v761, 0
      %v796 = vsub.s32 0, %v761
      %v797 = vsel %vm795, %v796, %v761
      %vm798 = vcmp.lt.s32.totalorder %v762, 0
      %v799 = vsub.s32 0, %v762
      %v800 = vsel %vm798, %v799, %v762
      %vm801 = vcmp.lt.s32.totalorder %v763, 0
      %v802 = vsub.s32 0, %v763
      %v803 = vsel %vm801, %v802, %v763
      %vm804 = vcmp.lt.s32.totalorder %v764, 0
      %v805 = vsub.s32 0, %v764
      %v806 = vsel %vm804, %v805, %v764
      %vm807 = vcmp.lt.s32.totalorder %v765, 0
      %v808 = vsub.s32 0, %v765
      %v809 = vsel %vm807, %v808, %v765
      %vm810 = vcmp.lt.s32.totalorder %v766, 0
      %v811 = vsub.s32 0, %v766
      %v812 = vsel %vm810, %v811, %v766
      %vm813 = vcmp.lt.s32.totalorder %v767, 0
      %v814 = vsub.s32 0, %v767
      %v815 = vsel %vm813, %v814, %v767
      %vm816 = vcmp.lt.s32.totalorder %v768, 0
      %v817 = vsub.s32 0, %v768
      %v818 = vsel %vm816, %v817, %v768
      %vm819 = vcmp.lt.s32.totalorder %v769, 0
      %v820 = vsub.s32 0, %v769
      %v821 = vsel %vm819, %v820, %v769
      %vm822 = vcmp.lt.s32.totalorder %v770, 0
      %v823 = vsub.s32 0, %v770
      %v824 = vsel %vm822, %v823, %v770
      %vm825 = vcmp.lt.s32.totalorder %v771, 0
      %v826 = vsub.s32 0, %v771
      %v827 = vsel %vm825, %v826, %v771
      %vm828 = vcmp.lt.s32.totalorder %v772, 0
      %v829 = vsub.s32 0, %v772
      %v830 = vsel %vm828, %v829, %v772
      %vm831 = vcmp.lt.s32.totalorder %v773, 0
      %v832 = vsub.s32 0, %v773
      %v833 = vsel %vm831, %v832, %v773
      %vm834 = vcmp.lt.s32.totalorder %v774, 0
      %v835 = vsub.s32 0, %v774
      %v836 = vsel %vm834, %v835, %v774
      %vm837 = vcmp.lt.s32.totalorder %v775, 0
      %v838 = vsub.s32 0, %v775
      %v839 = vsel %vm837, %v838, %v775
      %vm840 = vcmp.lt.s32.totalorder %v776, 0
      %v841 = vsub.s32 0, %v776
      %v842 = vsel %vm840, %v841, %v776
      %vm843 = vcmp.lt.s32.totalorder %v777, 0
      %v844 = vsub.s32 0, %v777
      %v845 = vsel %vm843, %v844, %v777
      %vm846 = vcmp.lt.s32.totalorder %v778, 0
      %v847 = vsub.s32 0, %v778
      %v848 = vsel %vm846, %v847, %v778
      %vm849 = vcmp.lt.s32.totalorder %v779, 0
      %v850 = vsub.s32 0, %v779
      %v851 = vsel %vm849, %v850, %v779
      %vm852 = vcmp.lt.s32.totalorder %v780, 0
      %v853 = vsub.s32 0, %v780
      %v854 = vsel %vm852, %v853, %v780
      %vm855 = vcmp.lt.s32.totalorder %v781, 0
      %v856 = vsub.s32 0, %v781
      %v857 = vsel %vm855, %v856, %v781
      %vm858 = vcmp.lt.s32.totalorder %v782, 0
      %v859 = vsub.s32 0, %v782
      %v860 = vsel %vm858, %v859, %v782
      %vm861 = vcmp.lt.s32.totalorder %v783, 0
      %v862 = vsub.s32 0, %v783
      %v863 = vsel %vm861, %v862, %v783
      %vm864 = vcmp.lt.s32.totalorder %v784, 0
      %v865 = vsub.s32 0, %v784
      %v866 = vsel %vm864, %v865, %v784
      %vm867 = vcmp.lt.s32.totalorder %v785, 0
      %v868 = vsub.s32 0, %v785
      %v869 = vsel %vm867, %v868, %v785
      %vm870 = vcmp.lt.s32.totalorder %v786, 0
      %v871 = vsub.s32 0, %v786
      %v872 = vsel %vm870, %v871, %v786
      %vm873 = vcmp.lt.s32.totalorder %v787, 0
      %v874 = vsub.s32 0, %v787
      %v875 = vsel %vm873, %v874, %v787
      %vm876 = vcmp.lt.s32.totalorder %v788, 0
      %v877 = vsub.s32 0, %v788
      %v878 = vsel %vm876, %v877, %v788
      %vm879 = vcmp.lt.s32.totalorder %v789, 0
      %v880 = vsub.s32 0, %v789
      %v881 = vsel %vm879, %v880, %v789
      %vm882 = vcmp.lt.s32.totalorder %v790, 0
      %v883 = vsub.s32 0, %v790
      %v884 = vsel %vm882, %v883, %v790
      %vm885 = vcmp.lt.s32.totalorder %v791, 0
      %v886 = vsub.s32 0, %v791
      %v887 = vsel %vm885, %v886, %v791
      %vm888 = vcmp.eq.s32.totalorder %v794, 0
      %vm889 = vcmp.eq.s32.totalorder %v797, 0
      %vm890 = vcmp.eq.s32.totalorder %v800, 0
      %vm891 = vcmp.eq.s32.totalorder %v803, 0
      %vm892 = vcmp.eq.s32.totalorder %v806, 0
      %vm893 = vcmp.eq.s32.totalorder %v809, 0
      %vm894 = vcmp.eq.s32.totalorder %v812, 0
      %vm895 = vcmp.eq.s32.totalorder %v815, 0
      %vm896 = vcmp.eq.s32.totalorder %v818, 0
      %vm897 = vcmp.eq.s32.totalorder %v821, 0
      %vm898 = vcmp.eq.s32.totalorder %v824, 0
      %vm899 = vcmp.eq.s32.totalorder %v827, 0
      %vm900 = vcmp.eq.s32.totalorder %v830, 0
      %vm901 = vcmp.eq.s32.totalorder %v833, 0
      %vm902 = vcmp.eq.s32.totalorder %v836, 0
      %vm903 = vcmp.eq.s32.totalorder %v839, 0
      %vm904 = vcmp.eq.s32.totalorder %v842, 0
      %vm905 = vcmp.eq.s32.totalorder %v845, 0
      %vm906 = vcmp.eq.s32.totalorder %v848, 0
      %vm907 = vcmp.eq.s32.totalorder %v851, 0
      %vm908 = vcmp.eq.s32.totalorder %v854, 0
      %vm909 = vcmp.eq.s32.totalorder %v857, 0
      %vm910 = vcmp.eq.s32.totalorder %v860, 0
      %vm911 = vcmp.eq.s32.totalorder %v863, 0
      %vm912 = vcmp.eq.s32.totalorder %v866, 0
      %vm913 = vcmp.eq.s32.totalorder %v869, 0
      %vm914 = vcmp.eq.s32.totalorder %v872, 0
      %vm915 = vcmp.eq.s32.totalorder %v875, 0
      %vm916 = vcmp.eq.s32.totalorder %v878, 0
      %vm917 = vcmp.eq.s32.totalorder %v881, 0
      %vm918 = vcmp.eq.s32.totalorder %v884, 0
      %vm919 = vcmp.eq.s32.totalorder %v887, 0
      %vm920 = vcmp.eq.s32.totalorder %v794, 4
      %vm921 = vcmp.eq.s32.totalorder %v797, 4
      %vm922 = vcmp.eq.s32.totalorder %v800, 4
      %vm923 = vcmp.eq.s32.totalorder %v803, 4
      %vm924 = vcmp.eq.s32.totalorder %v806, 4
      %vm925 = vcmp.eq.s32.totalorder %v809, 4
      %vm926 = vcmp.eq.s32.totalorder %v812, 4
      %vm927 = vcmp.eq.s32.totalorder %v815, 4
      %vm928 = vcmp.eq.s32.totalorder %v818, 4
      %vm929 = vcmp.eq.s32.totalorder %v821, 4
      %vm930 = vcmp.eq.s32.totalorder %v824, 4
      %vm931 = vcmp.eq.s32.totalorder %v827, 4
      %vm932 = vcmp.eq.s32.totalorder %v830, 4
      %vm933 = vcmp.eq.s32.totalorder %v833, 4
      %vm934 = vcmp.eq.s32.totalorder %v836, 4
      %vm935 = vcmp.eq.s32.totalorder %v839, 4
      %vm936 = vcmp.eq.s32.totalorder %v842, 4
      %vm937 = vcmp.eq.s32.totalorder %v845, 4
      %vm938 = vcmp.eq.s32.totalorder %v848, 4
      %vm939 = vcmp.eq.s32.totalorder %v851, 4
      %vm940 = vcmp.eq.s32.totalorder %v854, 4
      %vm941 = vcmp.eq.s32.totalorder %v857, 4
      %vm942 = vcmp.eq.s32.totalorder %v860, 4
      %vm943 = vcmp.eq.s32.totalorder %v863, 4
      %vm944 = vcmp.eq.s32.totalorder %v866, 4
      %vm945 = vcmp.eq.s32.totalorder %v869, 4
      %vm946 = vcmp.eq.s32.totalorder %v872, 4
      %vm947 = vcmp.eq.s32.totalorder %v875, 4
      %vm948 = vcmp.eq.s32.totalorder %v878, 4
      %vm949 = vcmp.eq.s32.totalorder %v881, 4
      %vm950 = vcmp.eq.s32.totalorder %v884, 4
      %vm951 = vcmp.eq.s32.totalorder %v887, 4
      %vm952 = vmor %vm888, %vm920
      %vm953 = vmor %vm889, %vm921
      %vm954 = vmor %vm890, %vm922
      %vm955 = vmor %vm891, %vm923
      %vm956 = vmor %vm892, %vm924
      %vm957 = vmor %vm893, %vm925
      %vm958 = vmor %vm894, %vm926
      %vm959 = vmor %vm895, %vm927
      %vm960 = vmor %vm896, %vm928
      %vm961 = vmor %vm897, %vm929
      %vm962 = vmor %vm898, %vm930
      %vm963 = vmor %vm899, %vm931
      %vm964 = vmor %vm900, %vm932
      %vm965 = vmor %vm901, %vm933
      %vm966 = vmor %vm902, %vm934
      %vm967 = vmor %vm903, %vm935
      %vm968 = vmor %vm904, %vm936
      %vm969 = vmor %vm905, %vm937
      %vm970 = vmor %vm906, %vm938
      %vm971 = vmor %vm907, %vm939
      %vm972 = vmor %vm908, %vm940
      %vm973 = vmor %vm909, %vm941
      %vm974 = vmor %vm910, %vm942
      %vm975 = vmor %vm911, %vm943
      %vm976 = vmor %vm912, %vm944
      %vm977 = vmor %vm913, %vm945
      %vm978 = vmor %vm914, %vm946
      %vm979 = vmor %vm915, %vm947
      %vm980 = vmor %vm916, %vm948
      %vm981 = vmor %vm917, %vm949
      %vm982 = vmor %vm918, %vm950
      %vm983 = vmor %vm919, %vm951
      %v984 = vld [vmem:[%s213] sm:$0xff]
      %v985 = vld [vmem:[%s213 + $0x8] sm:$0xff]
      %v986 = vld [vmem:[%s213 + $0x10] sm:$0xff]
      %v987 = vld [vmem:[%s213 + $0x18] sm:$0xff]
      %v988 = vld [vmem:[%s213 + $0x20] sm:$0xff]
      %v989 = vld [vmem:[%s213 + $0x28] sm:$0xff]
      %v990 = vld [vmem:[%s213 + $0x30] sm:$0xff]
      %v991 = vld [vmem:[%s213 + $0x38] sm:$0xff]
      %v992 = vld [vmem:[%s213 + $0x40] sm:$0xff]
      %v993 = vld [vmem:[%s213 + $0x48] sm:$0xff]
      %v994 = vld [vmem:[%s213 + $0x50] sm:$0xff]
      %v995 = vld [vmem:[%s213 + $0x58] sm:$0xff]
      %v996 = vld [vmem:[%s213 + $0x60] sm:$0xff]
      %v997 = vld [vmem:[%s213 + $0x68] sm:$0xff]
      %v998 = vld [vmem:[%s213 + $0x70] sm:$0xff]
      %v999 = vld [vmem:[%s213 + $0x78] sm:$0xff]
      %v1000 = vld [vmem:[%s3] sm:$0x3]
      %1001 = vset.pattern.permute.xlu0 0
      %1002 = vperm.xlu0 %1001, %v984
      %v1003 = vpop.permute.xlu0 %1002
      %1004 = vset.pattern.permute.xlu0 0
      %1005 = vperm.xlu0 %1004, %v985
      %v1006 = vpop.permute.xlu0 %1005
      %1007 = vset.pattern.permute.xlu0 0
      %1008 = vperm.xlu0 %1007, %v986
      %v1009 = vpop.permute.xlu0 %1008
      %1010 = vset.pattern.permute.xlu0 0
      %1011 = vperm.xlu0 %1010, %v987
      %v1012 = vpop.permute.xlu0 %1011
      %1013 = vset.pattern.permute.xlu0 0
      %1014 = vperm.xlu0 %1013, %v988
      %v1015 = vpop.permute.xlu0 %1014
      %1016 = vset.pattern.permute.xlu0 0
      %1017 = vperm.xlu0 %1016, %v989
      %v1018 = vpop.permute.xlu0 %1017
      %1019 = vset.pattern.permute.xlu0 0
      %1020 = vperm.xlu0 %1019, %v990
      %v1021 = vpop.permute.xlu0 %1020
      %1022 = vset.pattern.permute.xlu0 0
      %1023 = vperm.xlu0 %1022, %v991
      %v1024 = vpop.permute.xlu0 %1023
      %1025 = vset.pattern.permute.xlu0 0
      %1026 = vperm.xlu0 %1025, %v992
      %v1027 = vpop.permute.xlu0 %1026
      %1028 = vset.pattern.permute.xlu0 0
      %1029 = vperm.xlu0 %1028, %v993
      %v1030 = vpop.permute.xlu0 %1029
      %1031 = vset.pattern.permute.xlu0 0
      %1032 = vperm.xlu0 %1031, %v994
      %v1033 = vpop.permute.xlu0 %1032
      %1034 = vset.pattern.permute.xlu0 0
      %1035 = vperm.xlu0 %1034, %v995
      %v1036 = vpop.permute.xlu0 %1035
      %1037 = vset.pattern.permute.xlu0 0
      %1038 = vperm.xlu0 %1037, %v996
      %v1039 = vpop.permute.xlu0 %1038
      %1040 = vset.pattern.permute.xlu0 0
      %1041 = vperm.xlu0 %1040, %v997
      %v1042 = vpop.permute.xlu0 %1041
      %1043 = vset.pattern.permute.xlu0 0
      %1044 = vperm.xlu0 %1043, %v998
      %v1045 = vpop.permute.xlu0 %1044
      %1046 = vset.pattern.permute.xlu0 0
      %1047 = vperm.xlu0 %1046, %v999
      %v1048 = vpop.permute.xlu0 %1047
      %v1049 = vlaneseq
      %v1050 = vshrl.u32 %v1049, 7
      %v1051 = vsub.s32 0, %v1050
      %v1052 = vrot.slane %v1000, %v1051
      %v1053 = vlaneseq
      %v1054 = vshrl.u32 %v1053, 7
      %v1055 = vsub.s32 1, %v1054
      %v1056 = vrot.slane %v1000, %v1055
      %vm1057 = vcmp.eq.s32.totalorder %v1003, %v1052
      %vm1058 = vcmp.eq.s32.totalorder %v1003, %v1056
      %vm1059 = vcmp.eq.s32.totalorder %v1006, %v1052
      %vm1060 = vcmp.eq.s32.totalorder %v1006, %v1056
      %vm1061 = vcmp.eq.s32.totalorder %v1009, %v1052
      %vm1062 = vcmp.eq.s32.totalorder %v1009, %v1056
      %vm1063 = vcmp.eq.s32.totalorder %v1012, %v1052
      %vm1064 = vcmp.eq.s32.totalorder %v1012, %v1056
      %vm1065 = vcmp.eq.s32.totalorder %v1015, %v1052
      %vm1066 = vcmp.eq.s32.totalorder %v1015, %v1056
      %vm1067 = vcmp.eq.s32.totalorder %v1018, %v1052
      %vm1068 = vcmp.eq.s32.totalorder %v1018, %v1056
      %vm1069 = vcmp.eq.s32.totalorder %v1021, %v1052
      %vm1070 = vcmp.eq.s32.totalorder %v1021, %v1056
      %vm1071 = vcmp.eq.s32.totalorder %v1024, %v1052
      %vm1072 = vcmp.eq.s32.totalorder %v1024, %v1056
      %vm1073 = vcmp.eq.s32.totalorder %v1027, %v1052
      %vm1074 = vcmp.eq.s32.totalorder %v1027, %v1056
      %vm1075 = vcmp.eq.s32.totalorder %v1030, %v1052
      %vm1076 = vcmp.eq.s32.totalorder %v1030, %v1056
      %vm1077 = vcmp.eq.s32.totalorder %v1033, %v1052
      %vm1078 = vcmp.eq.s32.totalorder %v1033, %v1056
      %vm1079 = vcmp.eq.s32.totalorder %v1036, %v1052
      %vm1080 = vcmp.eq.s32.totalorder %v1036, %v1056
      %vm1081 = vcmp.eq.s32.totalorder %v1039, %v1052
      %vm1082 = vcmp.eq.s32.totalorder %v1039, %v1056
      %vm1083 = vcmp.eq.s32.totalorder %v1042, %v1052
      %vm1084 = vcmp.eq.s32.totalorder %v1042, %v1056
      %vm1085 = vcmp.eq.s32.totalorder %v1045, %v1052
      %vm1086 = vcmp.eq.s32.totalorder %v1045, %v1056
      %vm1087 = vcmp.eq.s32.totalorder %v1048, %v1052
      %vm1088 = vcmp.eq.s32.totalorder %v1048, %v1056
      %vm1089 = vmor %vm952, %vm1057
      %vm1090 = vmor %vm953, %vm1058
      %vm1091 = vmor %vm954, %vm1059
      %vm1092 = vmor %vm955, %vm1060
      %vm1093 = vmor %vm956, %vm1061
      %vm1094 = vmor %vm957, %vm1062
      %vm1095 = vmor %vm958, %vm1063
      %vm1096 = vmor %vm959, %vm1064
      %vm1097 = vmor %vm960, %vm1065
      %vm1098 = vmor %vm961, %vm1066
      %vm1099 = vmor %vm962, %vm1067
      %vm1100 = vmor %vm963, %vm1068
      %vm1101 = vmor %vm964, %vm1069
      %vm1102 = vmor %vm965, %vm1070
      %vm1103 = vmor %vm966, %vm1071
      %vm1104 = vmor %vm967, %vm1072
      %vm1105 = vmor %vm968, %vm1073
      %vm1106 = vmor %vm969, %vm1074
      %vm1107 = vmor %vm970, %vm1075
      %vm1108 = vmor %vm971, %vm1076
      %vm1109 = vmor %vm972, %vm1077
      %vm1110 = vmor %vm973, %vm1078
      %vm1111 = vmor %vm974, %vm1079
      %vm1112 = vmor %vm975, %vm1080
      %vm1113 = vmor %vm976, %vm1081
      %vm1114 = vmor %vm977, %vm1082
      %vm1115 = vmor %vm978, %vm1083
      %vm1116 = vmor %vm979, %vm1084
      %vm1117 = vmor %vm980, %vm1085
      %vm1118 = vmor %vm981, %vm1086
      %vm1119 = vmor %vm982, %vm1087
      %vm1120 = vmor %vm983, %vm1088
      %v1121 = vsel %vm1089, 0.0, %v517
      %v1122 = vsel %vm1090, 0.0, %v519
      %v1123 = vsel %vm1091, 0.0, %v521
      %v1124 = vsel %vm1092, 0.0, %v523
      %v1125 = vsel %vm1093, 0.0, %v527
      %v1126 = vsel %vm1094, 0.0, %v529
      %v1127 = vsel %vm1095, 0.0, %v531
      %v1128 = vsel %vm1096, 0.0, %v533
      %v1129 = vsel %vm1097, 0.0, %v537
      %v1130 = vsel %vm1098, 0.0, %v539
      %v1131 = vsel %vm1099, 0.0, %v541
      %v1132 = vsel %vm1100, 0.0, %v543
      %v1133 = vsel %vm1101, 0.0, %v547
      %v1134 = vsel %vm1102, 0.0, %v549
      %v1135 = vsel %vm1103, 0.0, %v551
      %v1136 = vsel %vm1104, 0.0, %v553
      %v1137 = vsel %vm1105, 0.0, %v557
      %v1138 = vsel %vm1106, 0.0, %v559
      %v1139 = vsel %vm1107, 0.0, %v561
      %v1140 = vsel %vm1108, 0.0, %v563
      %v1141 = vsel %vm1109, 0.0, %v567
      %v1142 = vsel %vm1110, 0.0, %v569
      %v1143 = vsel %vm1111, 0.0, %v571
      %v1144 = vsel %vm1112, 0.0, %v573
      %v1145 = vsel %vm1113, 0.0, %v577
      %v1146 = vsel %vm1114, 0.0, %v579
      %v1147 = vsel %vm1115, 0.0, %v581
      %v1148 = vsel %vm1116, 0.0, %v583
      %v1149 = vsel %vm1117, 0.0, %v587
      %v1150 = vsel %vm1118, 0.0, %v589
      %v1151 = vsel %vm1119, 0.0, %v591
      %v1152 = vsel %vm1120, 0.0, %v593
      %vm1153 = vcmp.lt.s32.totalorder %v758, 8
      %vm1154 = vcmp.lt.s32.totalorder %v759, 8
      %v1155 = vsel %vm1153, 1, 0
      %v1156 = vsel %vm1154, 1, 0
      %vm1157 = vcmp.eq.s32.totalorder %v1155, 1
      %vm1158 = vcmp.eq.s32.totalorder %v1156, 1
      %v1159 = vsel %vm1157, %v1121, -inf
      %v1160 = vsel %vm1158, %v1122, -inf
      %v1161 = vsel %vm1157, %v1123, -inf
      %v1162 = vsel %vm1158, %v1124, -inf
      %v1163 = vsel %vm1157, %v1125, -inf
      %v1164 = vsel %vm1158, %v1126, -inf
      %v1165 = vsel %vm1157, %v1127, -inf
      %v1166 = vsel %vm1158, %v1128, -inf
      %v1167 = vsel %vm1157, %v1129, -inf
      %v1168 = vsel %vm1158, %v1130, -inf
      %v1169 = vsel %vm1157, %v1131, -inf
      %v1170 = vsel %vm1158, %v1132, -inf
      %v1171 = vsel %vm1157, %v1133, -inf
      %v1172 = vsel %vm1158, %v1134, -inf
      %v1173 = vsel %vm1157, %v1135, -inf
      %v1174 = vsel %vm1158, %v1136, -inf
      %v1175 = vsel %vm1157, %v1137, -inf
      %v1176 = vsel %vm1158, %v1138, -inf
      %v1177 = vsel %vm1157, %v1139, -inf
      %v1178 = vsel %vm1158, %v1140, -inf
      %v1179 = vsel %vm1157, %v1141, -inf
      %v1180 = vsel %vm1158, %v1142, -inf
      %v1181 = vsel %vm1157, %v1143, -inf
      %v1182 = vsel %vm1158, %v1144, -inf
      %v1183 = vsel %vm1157, %v1145, -inf
      %v1184 = vsel %vm1158, %v1146, -inf
      %v1185 = vsel %vm1157, %v1147, -inf
      %v1186 = vsel %vm1158, %v1148, -inf
      %v1187 = vsel %vm1157, %v1149, -inf
      %v1188 = vsel %vm1158, %v1150, -inf
      %v1189 = vsel %vm1157, %v1151, -inf
      %v1190 = vsel %vm1158, %v1152, -inf
      %v1191 = vmax.f32 %v1159, %v1160
      %1192 = vmax.xlane.f32.xlu0 %v1191
      %v1193 = vpop.xlane.xlu0 %1192
      %v1194 = vmax.f32 %v1161, %v1162
      %1195 = vmax.xlane.f32.xlu0 %v1194
      %v1196 = vpop.xlane.xlu0 %1195
      %v1197 = vmax.f32 %v1163, %v1164
      %1198 = vmax.xlane.f32.xlu0 %v1197
      %v1199 = vpop.xlane.xlu0 %1198
      %v1200 = vmax.f32 %v1165, %v1166
      %1201 = vmax.xlane.f32.xlu0 %v1200
      %v1202 = vpop.xlane.xlu0 %1201
      %v1203 = vmax.f32 %v1167, %v1168
      %1204 = vmax.xlane.f32.xlu0 %v1203
      %v1205 = vpop.xlane.xlu0 %1204
      %v1206 = vmax.f32 %v1169, %v1170
      %1207 = vmax.xlane.f32.xlu0 %v1206
      %v1208 = vpop.xlane.xlu0 %1207
      %v1209 = vmax.f32 %v1171, %v1172
      %1210 = vmax.xlane.f32.xlu0 %v1209
      %v1211 = vpop.xlane.xlu0 %1210
      %v1212 = vmax.f32 %v1173, %v1174
      %1213 = vmax.xlane.f32.xlu0 %v1212
      %v1214 = vpop.xlane.xlu0 %1213
      %v1215 = vmax.f32 %v1175, %v1176
      %1216 = vmax.xlane.f32.xlu0 %v1215
      %v1217 = vpop.xlane.xlu0 %1216
      %v1218 = vmax.f32 %v1177, %v1178
      %1219 = vmax.xlane.f32.xlu0 %v1218
      %v1220 = vpop.xlane.xlu0 %1219
      %v1221 = vmax.f32 %v1179, %v1180
      %1222 = vmax.xlane.f32.xlu0 %v1221
      %v1223 = vpop.xlane.xlu0 %1222
      %v1224 = vmax.f32 %v1181, %v1182
      %1225 = vmax.xlane.f32.xlu0 %v1224
      %v1226 = vpop.xlane.xlu0 %1225
      %v1227 = vmax.f32 %v1183, %v1184
      %1228 = vmax.xlane.f32.xlu0 %v1227
      %v1229 = vpop.xlane.xlu0 %1228
      %v1230 = vmax.f32 %v1185, %v1186
      %1231 = vmax.xlane.f32.xlu0 %v1230
      %v1232 = vpop.xlane.xlu0 %1231
      %v1233 = vmax.f32 %v1187, %v1188
      %1234 = vmax.xlane.f32.xlu0 %v1233
      %v1235 = vpop.xlane.xlu0 %1234
      %v1236 = vmax.f32 %v1189, %v1190
      %1237 = vmax.xlane.f32.xlu0 %v1236
      %v1238 = vpop.xlane.xlu0 %1237
      %v1239 = vmax.f32 %v707, %v1193
      %v1240 = vmax.f32 %v708, %v1196
      %v1241 = vmax.f32 %v709, %v1199
      %v1242 = vmax.f32 %v710, %v1202
      %v1243 = vmax.f32 %v711, %v1205
      %v1244 = vmax.f32 %v712, %v1208
      %v1245 = vmax.f32 %v713, %v1211
      %v1246 = vmax.f32 %v714, %v1214
      %v1247 = vmax.f32 %v715, %v1217
      %v1248 = vmax.f32 %v716, %v1220
      %v1249 = vmax.f32 %v717, %v1223
      %v1250 = vmax.f32 %v718, %v1226
      %v1251 = vmax.f32 %v719, %v1229
      %v1252 = vmax.f32 %v720, %v1232
      %v1253 = vmax.f32 %v721, %v1235
      %v1254 = vmax.f32 %v722, %v1238
      %v1255 = vsub.f32 %v707, %v1239
      %v1256 = vsub.f32 %v708, %v1240
      %v1257 = vsub.f32 %v709, %v1241
      %v1258 = vsub.f32 %v710, %v1242
      %v1259 = vsub.f32 %v711, %v1243
      %v1260 = vsub.f32 %v712, %v1244
      %v1261 = vsub.f32 %v713, %v1245
      %v1262 = vsub.f32 %v714, %v1246
      %v1263 = vsub.f32 %v715, %v1247
      %v1264 = vsub.f32 %v716, %v1248
      %v1265 = vsub.f32 %v717, %v1249
      %v1266 = vsub.f32 %v718, %v1250
      %v1267 = vsub.f32 %v719, %v1251
      %v1268 = vsub.f32 %v720, %v1252
      %v1269 = vsub.f32 %v721, %v1253
      %v1270 = vsub.f32 %v722, %v1254
      %v1271 = vmul.f32 %v1255, 1.442695
      %v1272 = vpow.pop %v1271
      %v1273 = vmul.f32 %v1256, 1.442695
      %v1274 = vpow.pop %v1273
      %v1275 = vmul.f32 %v1257, 1.442695
      %v1276 = vpow.pop %v1275
      %v1277 = vmul.f32 %v1258, 1.442695
      %v1278 = vpow.pop %v1277
      %v1279 = vmul.f32 %v1259, 1.442695
      %v1280 = vpow.pop %v1279
      %v1281 = vmul.f32 %v1260, 1.442695
      %v1282 = vpow.pop %v1281
      %v1283 = vmul.f32 %v1261, 1.442695
      %v1284 = vpow.pop %v1283
      %v1285 = vmul.f32 %v1262, 1.442695
      %v1286 = vpow.pop %v1285
      %v1287 = vmul.f32 %v1263, 1.442695
      %v1288 = vpow.pop %v1287
      %v1289 = vmul.f32 %v1264, 1.442695
      %v1290 = vpow.pop %v1289
      %v1291 = vmul.f32 %v1265, 1.442695
      %v1292 = vpow.pop %v1291
      %v1293 = vmul.f32 %v1266, 1.442695
      %v1294 = vpow.pop %v1293
      %v1295 = vmul.f32 %v1267, 1.442695
      %v1296 = vpow.pop %v1295
      %v1297 = vmul.f32 %v1268, 1.442695
      %v1298 = vpow.pop %v1297
      %v1299 = vmul.f32 %v1269, 1.442695
      %v1300 = vpow.pop %v1299
      %v1301 = vmul.f32 %v1270, 1.442695
      %v1302 = vpow.pop %v1301
      %v1303 = vsub.f32 %v1159, %v1239
      %v1304 = vsub.f32 %v1160, %v1239
      %v1305 = vsub.f32 %v1161, %v1240
      %v1306 = vsub.f32 %v1162, %v1240
      %v1307 = vsub.f32 %v1163, %v1241
      %v1308 = vsub.f32 %v1164, %v1241
      %v1309 = vsub.f32 %v1165, %v1242
      %v1310 = vsub.f32 %v1166, %v1242
      %v1311 = vsub.f32 %v1167, %v1243
      %v1312 = vsub.f32 %v1168, %v1243
      %v1313 = vsub.f32 %v1169, %v1244
      %v1314 = vsub.f32 %v1170, %v1244
      %v1315 = vsub.f32 %v1171, %v1245
      %v1316 = vsub.f32 %v1172, %v1245
      %v1317 = vsub.f32 %v1173, %v1246
      %v1318 = vsub.f32 %v1174, %v1246
      %v1319 = vsub.f32 %v1175, %v1247
      %v1320 = vsub.f32 %v1176, %v1247
      %v1321 = vsub.f32 %v1177, %v1248
      %v1322 = vsub.f32 %v1178, %v1248
      %v1323 = vsub.f32 %v1179, %v1249
      %v1324 = vsub.f32 %v1180, %v1249
      %v1325 = vsub.f32 %v1181, %v1250
      %v1326 = vsub.f32 %v1182, %v1250
      %v1327 = vsub.f32 %v1183, %v1251
      %v1328 = vsub.f32 %v1184, %v1251
      %v1329 = vsub.f32 %v1185, %v1252
      %v1330 = vsub.f32 %v1186, %v1252
      %v1331 = vsub.f32 %v1187, %v1253
      %v1332 = vsub.f32 %v1188, %v1253
      %v1333 = vsub.f32 %v1189, %v1254
      %v1334 = vsub.f32 %v1190, %v1254
      %v1335 = vmul.f32 %v1303, 1.442695
      %v1336 = vpow.pop %v1335
      %v1337 = vmul.f32 %v1304, 1.442695
      %v1338 = vpow.pop %v1337
      %v1339 = vmul.f32 %v1305, 1.442695
      %v1340 = vpow.pop %v1339
      %v1341 = vmul.f32 %v1306, 1.442695
      %v1342 = vpow.pop %v1341
      %v1343 = vmul.f32 %v1307, 1.442695
      %v1344 = vpow.pop %v1343
      %v1345 = vmul.f32 %v1308, 1.442695
      %v1346 = vpow.pop %v1345
      %v1347 = vmul.f32 %v1309, 1.442695
      %v1348 = vpow.pop %v1347
      %v1349 = vmul.f32 %v1310, 1.442695
      %v1350 = vpow.pop %v1349
      %v1351 = vmul.f32 %v1311, 1.442695
      %v1352 = vpow.pop %v1351
      %v1353 = vmul.f32 %v1312, 1.442695
      %v1354 = vpow.pop %v1353
      %v1355 = vmul.f32 %v1313, 1.442695
      %v1356 = vpow.pop %v1355
      %v1357 = vmul.f32 %v1314, 1.442695
      %v1358 = vpow.pop %v1357
      %v1359 = vmul.f32 %v1315, 1.442695
      %v1360 = vpow.pop %v1359
      %v1361 = vmul.f32 %v1316, 1.442695
      %v1362 = vpow.pop %v1361
      %v1363 = vmul.f32 %v1317, 1.442695
      %v1364 = vpow.pop %v1363
      %v1365 = vmul.f32 %v1318, 1.442695
      %v1366 = vpow.pop %v1365
      %v1367 = vmul.f32 %v1319, 1.442695
      %v1368 = vpow.pop %v1367
      %v1369 = vmul.f32 %v1320, 1.442695
      %v1370 = vpow.pop %v1369
      %v1371 = vmul.f32 %v1321, 1.442695
      %v1372 = vpow.pop %v1371
      %v1373 = vmul.f32 %v1322, 1.442695
      %v1374 = vpow.pop %v1373
      %v1375 = vmul.f32 %v1323, 1.442695
      %v1376 = vpow.pop %v1375
      %v1377 = vmul.f32 %v1324, 1.442695
      %v1378 = vpow.pop %v1377
      %v1379 = vmul.f32 %v1325, 1.442695
      %v1380 = vpow.pop %v1379
      %v1381 = vmul.f32 %v1326, 1.442695
      %v1382 = vpow.pop %v1381
      %v1383 = vmul.f32 %v1327, 1.442695
      %v1384 = vpow.pop %v1383
      %v1385 = vmul.f32 %v1328, 1.442695
      %v1386 = vpow.pop %v1385
      %v1387 = vmul.f32 %v1329, 1.442695
      %v1388 = vpow.pop %v1387
      %v1389 = vmul.f32 %v1330, 1.442695
      %v1390 = vpow.pop %v1389
      %v1391 = vmul.f32 %v1331, 1.442695
      %v1392 = vpow.pop %v1391
      %v1393 = vmul.f32 %v1332, 1.442695
      %v1394 = vpow.pop %v1393
      %v1395 = vmul.f32 %v1333, 1.442695
      %v1396 = vpow.pop %v1395
      %v1397 = vmul.f32 %v1334, 1.442695
      %v1398 = vpow.pop %v1397
      %v1399 = vadd.f32 %v1336, %v1338
      %1400 = vadd.xlane.f32.xlu0 %v1399
      %v1401 = vpop.xlane.xlu0 %1400
      %v1402 = vadd.f32 %v1340, %v1342
      %1403 = vadd.xlane.f32.xlu0 %v1402
      %v1404 = vpop.xlane.xlu0 %1403
      %v1405 = vadd.f32 %v1344, %v1346
      %1406 = vadd.xlane.f32.xlu0 %v1405
      %v1407 = vpop.xlane.xlu0 %1406
      %v1408 = vadd.f32 %v1348, %v1350
      %1409 = vadd.xlane.f32.xlu0 %v1408
      %v1410 = vpop.xlane.xlu0 %1409
      %v1411 = vadd.f32 %v1352, %v1354
      %1412 = vadd.xlane.f32.xlu0 %v1411
      %v1413 = vpop.xlane.xlu0 %1412
      %v1414 = vadd.f32 %v1356, %v1358
      %1415 = vadd.xlane.f32.xlu0 %v1414
      %v1416 = vpop.xlane.xlu0 %1415
      %v1417 = vadd.f32 %v1360, %v1362
      %1418 = vadd.xlane.f32.xlu0 %v1417
      %v1419 = vpop.xlane.xlu0 %1418
      %v1420 = vadd.f32 %v1364, %v1366
      %1421 = vadd.xlane.f32.xlu0 %v1420
      %v1422 = vpop.xlane.xlu0 %1421
      %v1423 = vadd.f32 %v1368, %v1370
      %1424 = vadd.xlane.f32.xlu0 %v1423
      %v1425 = vpop.xlane.xlu0 %1424
      %v1426 = vadd.f32 %v1372, %v1374
      %1427 = vadd.xlane.f32.xlu0 %v1426
      %v1428 = vpop.xlane.xlu0 %1427
      %v1429 = vadd.f32 %v1376, %v1378
      %1430 = vadd.xlane.f32.xlu0 %v1429
      %v1431 = vpop.xlane.xlu0 %1430
      %v1432 = vadd.f32 %v1380, %v1382
      %1433 = vadd.xlane.f32.xlu0 %v1432
      %v1434 = vpop.xlane.xlu0 %1433
      %v1435 = vadd.f32 %v1384, %v1386
      %1436 = vadd.xlane.f32.xlu0 %v1435
      %v1437 = vpop.xlane.xlu0 %1436
      %v1438 = vadd.f32 %v1388, %v1390
      %1439 = vadd.xlane.f32.xlu0 %v1438
      %v1440 = vpop.xlane.xlu0 %1439
      %v1441 = vadd.f32 %v1392, %v1394
      %1442 = vadd.xlane.f32.xlu0 %v1441
      %v1443 = vpop.xlane.xlu0 %1442
      %v1444 = vadd.f32 %v1396, %v1398
      %1445 = vadd.xlane.f32.xlu0 %v1444
      %v1446 = vpop.xlane.xlu0 %1445
      %v1447 = vadd.f32 %v1272, %v1401
      %v1448 = vadd.f32 %v1274, %v1404
      %v1449 = vadd.f32 %v1276, %v1407
      %v1450 = vadd.f32 %v1278, %v1410
      %v1451 = vadd.f32 %v1280, %v1413
      %v1452 = vadd.f32 %v1282, %v1416
      %v1453 = vadd.f32 %v1284, %v1419
      %v1454 = vadd.f32 %v1286, %v1422
      %v1455 = vadd.f32 %v1288, %v1425
      %v1456 = vadd.f32 %v1290, %v1428
      %v1457 = vadd.f32 %v1292, %v1431
      %v1458 = vadd.f32 %v1294, %v1434
      %v1459 = vadd.f32 %v1296, %v1437
      %v1460 = vadd.f32 %v1298, %v1440
      %v1461 = vadd.f32 %v1300, %v1443
      %v1462 = vadd.f32 %v1302, %v1446
      %v1463 = vlog2.pop %v1447
      %v1464 = vmul.f32 %v1463, 0.6931472
      %v1465 = vlog2.pop %v1448
      %v1466 = vmul.f32 %v1465, 0.6931472
      %v1467 = vlog2.pop %v1449
      %v1468 = vmul.f32 %v1467, 0.6931472
      %v1469 = vlog2.pop %v1450
      %v1470 = vmul.f32 %v1469, 0.6931472
      %v1471 = vlog2.pop %v1451
      %v1472 = vmul.f32 %v1471, 0.6931472
      %v1473 = vlog2.pop %v1452
      %v1474 = vmul.f32 %v1473, 0.6931472
      %v1475 = vlog2.pop %v1453
      %v1476 = vmul.f32 %v1475, 0.6931472
      %v1477 = vlog2.pop %v1454
      %v1478 = vmul.f32 %v1477, 0.6931472
      %v1479 = vlog2.pop %v1455
      %v1480 = vmul.f32 %v1479, 0.6931472
      %v1481 = vlog2.pop %v1456
      %v1482 = vmul.f32 %v1481, 0.6931472
      %v1483 = vlog2.pop %v1457
      %v1484 = vmul.f32 %v1483, 0.6931472
      %v1485 = vlog2.pop %v1458
      %v1486 = vmul.f32 %v1485, 0.6931472
      %v1487 = vlog2.pop %v1459
      %v1488 = vmul.f32 %v1487, 0.6931472
      %v1489 = vlog2.pop %v1460
      %v1490 = vmul.f32 %v1489, 0.6931472
      %v1491 = vlog2.pop %v1461
      %v1492 = vmul.f32 %v1491, 0.6931472
      %v1493 = vlog2.pop %v1462
      %v1494 = vmul.f32 %v1493, 0.6931472
      %v1495 = vadd.f32 %v1239, %v1464
      %v1496 = vadd.f32 %v1240, %v1466
      %v1497 = vadd.f32 %v1241, %v1468
      %v1498 = vadd.f32 %v1242, %v1470
      %v1499 = vadd.f32 %v1243, %v1472
      %v1500 = vadd.f32 %v1244, %v1474
      %v1501 = vadd.f32 %v1245, %v1476
      %v1502 = vadd.f32 %v1246, %v1478
      %v1503 = vadd.f32 %v1247, %v1480
      %v1504 = vadd.f32 %v1248, %v1482
      %v1505 = vadd.f32 %v1249, %v1484
      %v1506 = vadd.f32 %v1250, %v1486
      %v1507 = vadd.f32 %v1251, %v1488
      %v1508 = vadd.f32 %v1252, %v1490
      %v1509 = vadd.f32 %v1253, %v1492
      %v1510 = vadd.f32 %v1254, %v1494
      %v1511 = vsub.f32 %v1495, %v707
      %v1512 = vsub.f32 %v1496, %v708
      %v1513 = vsub.f32 %v1497, %v709
      %v1514 = vsub.f32 %v1498, %v710
      %v1515 = vsub.f32 %v1499, %v711
      %v1516 = vsub.f32 %v1500, %v712
      %v1517 = vsub.f32 %v1501, %v713
      %v1518 = vsub.f32 %v1502, %v714
      %v1519 = vsub.f32 %v1503, %v715
      %v1520 = vsub.f32 %v1504, %v716
      %v1521 = vsub.f32 %v1505, %v717
      %v1522 = vsub.f32 %v1506, %v718
      %v1523 = vsub.f32 %v1507, %v719
      %v1524 = vsub.f32 %v1508, %v720
      %v1525 = vsub.f32 %v1509, %v721
      %v1526 = vsub.f32 %v1510, %v722
      %vm1527 = vcmp.lt.s32.totalorder %v741, 8
      %vm1528 = vcmp.lt.s32.totalorder %v742, 8
      %vm1529 = vcmp.lt.s32.totalorder %v743, 8
      %vm1530 = vcmp.lt.s32.totalorder %v744, 8
      %vm1531 = vcmp.lt.s32.totalorder %v745, 8
      %vm1532 = vcmp.lt.s32.totalorder %v746, 8
      %vm1533 = vcmp.lt.s32.totalorder %v747, 8
      %vm1534 = vcmp.lt.s32.totalorder %v748, 8
      %vm1535 = vcmp.lt.s32.totalorder %v749, 8
      %vm1536 = vcmp.lt.s32.totalorder %v750, 8
      %vm1537 = vcmp.lt.s32.totalorder %v751, 8
      %vm1538 = vcmp.lt.s32.totalorder %v752, 8
      %vm1539 = vcmp.lt.s32.totalorder %v753, 8
      %vm1540 = vcmp.lt.s32.totalorder %v754, 8
      %vm1541 = vcmp.lt.s32.totalorder %v755, 8
      %vm1542 = vcmp.lt.s32.totalorder %v756, 8
      %v1543 = vsel %vm1527, %v1511, 0.0
      %v1544 = vsel %vm1528, %v1512, 0.0
      %v1545 = vsel %vm1529, %v1513, 0.0
      %v1546 = vsel %vm1530, %v1514, 0.0
      %v1547 = vsel %vm1531, %v1515, 0.0
      %v1548 = vsel %vm1532, %v1516, 0.0
      %v1549 = vsel %vm1533, %v1517, 0.0
      %v1550 = vsel %vm1534, %v1518, 0.0
      %v1551 = vsel %vm1535, %v1519, 0.0
      %v1552 = vsel %vm1536, %v1520, 0.0
      %v1553 = vsel %vm1537, %v1521, 0.0
      %v1554 = vsel %vm1538, %v1522, 0.0
      %v1555 = vsel %vm1539, %v1523, 0.0
      %v1556 = vsel %vm1540, %v1524, 0.0
      %v1557 = vsel %vm1541, %v1525, 0.0
      %v1558 = vsel %vm1542, %v1526, 0.0
      %v1559 = vadd.f32 %v1543, %v1544
      %v1560 = vadd.f32 %v1559, %v1545
      %v1561 = vadd.f32 %v1560, %v1546
      %v1562 = vadd.f32 %v1561, %v1547
      %v1563 = vadd.f32 %v1562, %v1548
      %v1564 = vadd.f32 %v1563, %v1549
      %v1565 = vadd.f32 %v1564, %v1550
      %v1566 = vadd.f32 %v1565, %v1551
      %v1567 = vadd.f32 %v1566, %v1552
      %v1568 = vadd.f32 %v1567, %v1553
      %v1569 = vadd.f32 %v1568, %v1554
      %v1570 = vadd.f32 %v1569, %v1555
      %v1571 = vadd.f32 %v1570, %v1556
      %v1572 = vadd.f32 %v1571, %v1557
      %v1573 = vadd.f32 %v1572, %v1558
      %v1574 = vrot.slane %v1573, 4
      %v1575 = vadd.f32 %v1573, %v1574
      %v1576 = vrot.slane %v1575, 2
      %v1577 = vadd.f32 %v1575, %v1576
      %v1578 = vrot.slane %v1577, 1
      %v1579 = vadd.f32 %v1577, %v1578
      %vm1580 = vcmask 0
      %1581 = vst.msk [vmem:[%s217] sm:$0x1] %vm1580, %v1579
      %p1582 = scmp.lt.s32.totalorder %s15, 1
      %s1583 = scalar_select %p1582, %s15, 1
      %s1584 = scalar_lea.vmem %s4, %s1583
      // Predicated region
      $region37: #{tpu_custom_call.1} parent=35 // pred_check
        %p1585 = pneg %p127
      $region38: #{tpu_custom_call.1} parent=35 // pred_check_branch
        %1587 = sbr.rel (%p1585) target = $region40
      $region39: #{tpu_custom_call.1} parent=35 // pred_region
        _
      $region40: #{tpu_custom_call.1} parent=35 // pred_fallthru
        _
    $region36: #{tpu_custom_call.1} parent=5 // pred_fallthru
      _
    %p1588 = scmp.le.s32.totalorder 2, %s10
    // Predicated region
    $region41: #{tpu_custom_call.1} parent=5 // pred_check
      %p1589 = pneg %p1588
    $region42: #{tpu_custom_call.1} parent=5 // pred_check_branch
      %1591 = sbr.rel (%p1589) target = $region44
    $region43: #{tpu_custom_call.1} parent=5 // pred_region
      %s1592 = ssub.s32 %s10, 2
      // Predicated region
      $region45: #{tpu_custom_call.1} parent=43 // pred_check
        %p1593 = pneg %p133
      $region46: #{tpu_custom_call.1} parent=43 // pred_check_branch
        %1595 = sbr.rel (%p1593) target = $region48
      $region47: #{tpu_custom_call.1} parent=43 // pred_region
        %p1596 = scmp.lt.s32.totalorder %s16, 1
        %s1597 = scalar_select %p1596, %s16, 1
        %s1598 = scalar_lea.vmem %s4, %s1597
      $region48: #{tpu_custom_call.1} parent=43 // pred_fallthru
        _
    $region44: #{tpu_custom_call.1} parent=5 // pred_fallthru
      _
  $region6: #{tpu_custom_call.1} parent=0 // loop_footer
    %s14 = sadd.s32 1, %s10
  $region7: #{tpu_custom_call.1} parent=0 // loop_footer_branch
    %9 = sbr.rel target = $region3
  $region8: #{tpu_custom_call.1} parent=0 // loop_exit
    _

</llo_original>
